<compile_context>
chip_gen: v5e
topology: v5e:2x2
jax: 0.10.0
libtpu: 0.0.40
codegen_flags: <defaults>
</compile_context>

<pallas_src>
import jax
import jax.numpy as jnp
from jax import lax
from jax.experimental import pallas as pl
from jax.experimental.pallas import tpu as pltpu


# ----------------------------------------------------------------------------
# Fused Pallas kernel: expand PW -> depthwise 3x3x3 -> project PW (+res)
# ----------------------------------------------------------------------------
def _make_fused_kernel(*, D, H, W, has_expand, use_res):
    M = D * H * W
    HW = H * W

    def kernel(*refs):
        if has_expand:
            (x_ref, we_ref, se_ref, be_ref, tap_ref, msk_ref,
             sd_ref, bd_ref, wp_ref, sp_ref, bp_ref, o_ref) = refs
        else:
            (x_ref, tap_ref, msk_ref,
             sd_ref, bd_ref, wp_ref, sp_ref, bp_ref, o_ref) = refs

        xb = x_ref[0]                                   # (C, M) bf16, lane-dense

        # 1) expansion 1x1x1 conv (bf16 MXU, f32 accumulation) + folded BN + ReLU6.
        #    Hidden activation stays in VMEM/vregs -- never written to HBM.
        if has_expand:
            h = jnp.dot(we_ref[...], xb, preferred_element_type=jnp.float32)
            h = h * se_ref[...] + be_ref[...]           # (hidden, M) * (hidden, 1)
            h = jnp.clip(h, 0.0, 6.0)
        else:
            h = xb.astype(jnp.float32)                  # hidden == C

        # 2) depthwise 3x3x3, stride 1, pad 1, over the flattened DHW lane axis:
        #    static lane-rolls + precomputed boundary masks (zero padding emulation).
        acc = jnp.zeros_like(h)
        for kd in range(3):
            for kh in range(3):
                for kw in range(3):
                    i = kd * 9 + kh * 3 + kw
                    off = (kd - 1) * HW + (kh - 1) * W + (kw - 1)
                    # want src[p] = h[p + off]; out-of-range positions are masked.
                    src = h if off == 0 else jnp.roll(h, -off, axis=1)
                    contrib = src * tap_ref[:, i:i + 1]          # (hidden, M)
                    if not (kd == 1 and kh == 1 and kw == 1):
                        contrib = contrib * msk_ref[i:i + 1, :]  # (1, M) boundary mask
                    acc = acc + contrib
        hdw = jnp.clip(acc * sd_ref[...] + bd_ref[...], 0.0, 6.0)

        # 3) projection 1x1x1 conv + folded BN (+ fused residual, no activation).
        y = jnp.dot(wp_ref[...].astype(jnp.float32), hdw,
                    preferred_element_type=jnp.float32)           # (oup, M)
        y = y * sp_ref[...] + bp_ref[...]
        if use_res:
            y = y + xb.astype(jnp.float32)
        o_ref[0] = y.astype(o_ref.dtype)

    return kernel


# ----------------------------------------------------------------------------
# BN folding & parameter init (shapes match the PyTorch module)
# ----------------------------------------------------------------------------
def fold_bn(gamma, beta, mean, var, eps=1e-5):
    scale = gamma / jnp.sqrt(var + eps)
    shift = beta - mean * scale
    return scale, shift


def init_params(key, inp, oup, expand_ratio):
    hidden = int(round(inp * expand_ratio))
    ks = jax.random.split(key, 16)

    def u(k, shape, lo, hi):
        return jax.random.uniform(k, shape, jnp.float32, lo, hi)

    p = {}
    if expand_ratio != 1:
        p["w_exp"] = u(ks[0], (hidden, inp, 1, 1, 1), -0.5, 0.5)       # Conv3d 1x1x1
        p["bn_exp"] = (u(ks[1], (hidden,), 0.5, 1.5),                  # gamma
                       u(ks[2], (hidden,), -0.5, 0.5),                 # beta
                       u(ks[3], (hidden,), -0.5, 0.5),                 # running_mean
                       u(ks[4], (hidden,), 0.5, 1.5))                  # running_var
    p["w_dw"] = u(ks[5], (hidden, 1, 3, 3, 3), -0.5, 0.5)              # depthwise Conv3d
    p["bn_dw"] = (u(ks[6], (hidden,), 0.5, 1.5),
                  u(ks[7], (hidden,), -0.5, 0.5),
                  u(ks[8], (hidden,), -0.5, 0.5),
                  u(ks[9], (hidden,), 0.5, 1.5))
    p["w_proj"] = u(ks[10], (oup, hidden, 1, 1, 1), -0.5, 0.5)         # Conv3d 1x1x1
    p["bn_proj"] = (u(ks[11], (oup,), 0.5, 1.5),
                    u(ks[12], (oup,), -0.5, 0.5),
                    u(ks[13], (oup,), -0.5, 0.5),
                    u(ks[14], (oup,), 0.5, 1.5))
    return p


# ----------------------------------------------------------------------------
# InvertedResidual forward (fused Pallas path)
# ----------------------------------------------------------------------------
def inverted_residual_forward(x_ncdhw, params, inp, oup, stride, expand_ratio):
    assert stride == (1, 1, 1), "TODO(synk): strides != (1,1,1) not implemented"
    hidden = int(round(inp * expand_ratio))
    has_expand = expand_ratio != 1
    use_res = (stride == (1, 1, 1)) and (inp == oup)

    N, C, D, H, W = x_ncdhw.shape
    assert C == inp
    M = D * H * W

    # NCDHW is already channel-major: a free reshape puts all of D*H*W on the lane
    # axis.  bf16 halves HBM traffic (in a full net activations would flow bf16).
    x = x_ncdhw.reshape(N, C, M).astype(jnp.bfloat16)

    # ---- host-side parameter prep (tiny, one-time glue) ----
    sd, bd = fold_bn(*params["bn_dw"])
    sp, bp = fold_bn(*params["bn_proj"])
    taps = params["w_dw"].reshape(hidden, 27).astype(jnp.float32)        # (hidden, 27)
    w_proj = params["w_proj"].reshape(oup, hidden).astype(jnp.bfloat16)  # (oup, hidden)

    # Boundary masks for the flattened-DHW stencil: mask[i, p] = 0 where tap i would
    # read outside the (zero-padded) volume.  Shape (27, M), f32.
    def ok(n, k):
        r = jnp.arange(n) + k - 1
        return (r >= 0) & (r < n)
    masks = jnp.stack([
        (ok(D, kd)[:, None, None] & ok(H, kh)[None, :, None]
         & ok(W, kw)[None, None, :]).reshape(M)
        for kd in range(3) for kh in range(3) for kw in range(3)
    ]).astype(jnp.float32)                                               # (27, M)

    args = [x]
    in_specs = [pl.BlockSpec((1, C, M), lambda n: (n, 0, 0))]

    def full(a):  # whole-array (weight) operand, same block every grid step
        in_specs.append(pl.BlockSpec(a.shape, lambda n: (0, 0)))
        args.append(a)

    if has_expand:
        se, be = fold_bn(*params["bn_exp"])
        full(params["w_exp"].reshape(hidden, inp).astype(jnp.bfloat16))  # (hidden, C)
        full(se.reshape(hidden, 1).astype(jnp.float32))
        full(be.reshape(hidden, 1).astype(jnp.float32))
    full(taps)
    full(masks)
    full(sd.reshape(hidden, 1).astype(jnp.float32))
    full(bd.reshape(hidden, 1).astype(jnp.float32))
    full(w_proj)
    full(sp.reshape(oup, 1).astype(jnp.float32))
    full(bp.reshape(oup, 1).astype(jnp.float32))

    kernel = _make_fused_kernel(D=D, H=H, W=W,
                                has_expand=has_expand, use_res=use_res)

    out = pl.pallas_call(
        kernel,
        out_shape=jax.ShapeDtypeStruct((N, oup, M), jnp.float32),
        grid=(N,),                       # even 'parallel' extent -> both TCs on v7x
        in_specs=in_specs,
        out_specs=pl.BlockSpec((1, oup, M), lambda n: (n, 0, 0)),
        compiler_params=pltpu.CompilerParams(
            dimension_semantics=("parallel",),
            vmem_limit_bytes=32 * 1024 * 1024),
    )(*args)

    return out.reshape(N, oup, D, H, W)   # back to NCDHW (free reshape, no transpose)


# ----------------------------------------------------------------------------
# Pure-JAX reference (NCDHW, lax convs) for correctness checking
# ----------------------------------------------------------------------------
def reference_forward(x, params, inp, oup, stride, expand_ratio, eps=1e-5):
    hidden = int(round(inp * expand_ratio))
    use_res = (stride == (1, 1, 1)) and (inp == oup)
    dn = ("NCDHW", "OIDHW", "NCDHW")
    q = lambda t: t.astype(jnp.bfloat16).astype(jnp.float32)  # match kernel bf16 inputs

    def bn(h, gbmv):
        g, b, m, v = (t.reshape(1, -1, 1, 1, 1) for t in gbmv)
        return g * (h - m) / jnp.sqrt(v + eps) + b

    xq = q(x)
    h = xq
    if expand_ratio != 1:
        h = lax.conv_general_dilated(h, q(params["w_exp"]), (1, 1, 1), "VALID",
                                     dimension_numbers=dn,
                                     precision=lax.Precision.HIGHEST)
        h = jnp.clip(bn(h, params["bn_exp"]), 0.0, 6.0)
    h = lax.conv_general_dilated(h, params["w_dw"], stride, [(1, 1)] * 3,
                                 dimension_numbers=dn, feature_group_count=hidden,
                                 precision=lax.Precision.HIGHEST)
    h = jnp.clip(bn(h, params["bn_dw"]), 0.0, 6.0)
    h = lax.conv_general_dilated(h, q(params["w_proj"]), (1, 1, 1), "VALID",
                                 dimension_numbers=dn,
                                 precision=lax.Precision.HIGHEST)
    h = bn(h, params["bn_proj"])
    return xq + h if use_res else h


# ----------------------------------------------------------------------------
# Demo
# ----------------------------------------------------------------------------
if __name__ == "__main__":
    inp, oup = 8, 8
    expand_ratio = 2
    stride = (1, 1, 1)
    N, D, H, W = 2, 4, 8, 8          # M = D*H*W = 256 -> lane-dense

    key = jax.random.PRNGKey(0)
    kx, kp = jax.random.split(key)
    x = jax.random.normal(kx, (N, inp, D, H, W), jnp.float32)   # NCDHW, like PyTorch
    params = init_params(kp, inp, oup, expand_ratio)

    out = inverted_residual_forward(x, params, inp, oup, stride, expand_ratio)
    out = jax.block_until_ready(out)

    ref = reference_forward(x, params, inp, oup, stride, expand_ratio)
    assert out.shape == ref.shape == (N, oup, D, H, W), (out.shape, ref.shape)
    err = float(jnp.max(jnp.abs(out - ref)))
    if err > 2e-3:
        raise AssertionError(f"Pallas output mismatch vs reference, max abs err={err}")

    print("KERNEL_OK")
</pallas_src>

<mosaic_0001>
module attributes {stable_mosaic.version = 11 : i64} {
  func.func @kernel(%arg0: i32, %arg1: memref<1x8x256xbf16, #tpu.memory_space<vmem>>, %arg2: memref<16x8xbf16, #tpu.memory_space<vmem>>, %arg3: memref<16x1xf32, #tpu.memory_space<vmem>>, %arg4: memref<16x1xf32, #tpu.memory_space<vmem>>, %arg5: memref<16x27xf32, #tpu.memory_space<vmem>>, %arg6: memref<27x256xf32, #tpu.memory_space<vmem>>, %arg7: memref<16x1xf32, #tpu.memory_space<vmem>>, %arg8: memref<16x1xf32, #tpu.memory_space<vmem>>, %arg9: memref<8x16xbf16, #tpu.memory_space<vmem>>, %arg10: memref<8x1xf32, #tpu.memory_space<vmem>>, %arg11: memref<8x1xf32, #tpu.memory_space<vmem>>, %arg12: memref<1x8x256xf32, #tpu.memory_space<vmem>>) attributes {dimension_semantics = [#tpu.dimension_semantics<parallel>], iteration_bounds = array<i64: 2>, scalar_prefetch = 0 : i64, scratch_operands = 0 : i64, tpu.core_type = #tpu.core_type<tc>, window_params = [{transform_indices = @transform_0, window_bounds = array<i64: 1, 8, 256>}, {pipeline_mode = #tpu.pipeline_mode<synchronous>, transform_indices = @transform_1, window_bounds = array<i64: 16, 8>}, {pipeline_mode = #tpu.pipeline_mode<synchronous>, transform_indices = @transform_2, window_bounds = array<i64: 16, 1>}, {pipeline_mode = #tpu.pipeline_mode<synchronous>, transform_indices = @transform_3, window_bounds = array<i64: 16, 1>}, {pipeline_mode = #tpu.pipeline_mode<synchronous>, transform_indices = @transform_4, window_bounds = array<i64: 16, 27>}, {pipeline_mode = #tpu.pipeline_mode<synchronous>, transform_indices = @transform_5, window_bounds = array<i64: 27, 256>}, {pipeline_mode = #tpu.pipeline_mode<synchronous>, transform_indices = @transform_6, window_bounds = array<i64: 16, 1>}, {pipeline_mode = #tpu.pipeline_mode<synchronous>, transform_indices = @transform_7, window_bounds = array<i64: 16, 1>}, {pipeline_mode = #tpu.pipeline_mode<synchronous>, transform_indices = @transform_8, window_bounds = array<i64: 8, 16>}, {pipeline_mode = #tpu.pipeline_mode<synchronous>, transform_indices = @transform_9, window_bounds = array<i64: 8, 1>}, {pipeline_mode = #tpu.pipeline_mode<synchronous>, transform_indices = @transform_10, window_bounds = array<i64: 8, 1>}, {transform_indices = @transform_11, window_bounds = array<i64: 1, 8, 256>}]} {
    %c0 = arith.constant 0 : index
    %c0_0 = arith.constant 0 : index
    %c0_1 = arith.constant 0 : index
    %0 = vector.load %arg1[%c0, %c0_0, %c0_1] : memref<1x8x256xbf16, #tpu.memory_space<vmem>>, vector<1x8x256xbf16>
    %1 = vector.shape_cast %0 : vector<1x8x256xbf16> to vector<8x256xbf16>
    %c0_2 = arith.constant 0 : index
    %c0_3 = arith.constant 0 : index
    %2 = vector.load %arg2[%c0_2, %c0_3] : memref<16x8xbf16, #tpu.memory_space<vmem>>, vector<16x8xbf16>
    %cst = arith.constant dense<0.000000e+00> : vector<16x256xf32>
    %3 = tpu.matmul %2, %1, %cst {dimension_numbers = #tpu.dot_dimension_numbers<[1], [0], [0], [1], [0, 0, 1, 1], [], []>} : vector<16x8xbf16>, vector<8x256xbf16>, vector<16x256xf32> -> vector<16x256xf32>
    %c0_4 = arith.constant 0 : index
    %c0_5 = arith.constant 0 : index
    %4 = vector.load %arg3[%c0_4, %c0_5] : memref<16x1xf32, #tpu.memory_space<vmem>>, vector<16x1xf32>
    %5 = vector.broadcast %4 : vector<16x1xf32> to vector<16x256xf32>
    %6 = arith.mulf %3, %5 : vector<16x256xf32>
    %c0_6 = arith.constant 0 : index
    %c0_7 = arith.constant 0 : index
    %7 = vector.load %arg4[%c0_6, %c0_7] : memref<16x1xf32, #tpu.memory_space<vmem>>, vector<16x1xf32>
    %8 = vector.broadcast %7 : vector<16x1xf32> to vector<16x256xf32>
    %9 = arith.addf %6, %8 : vector<16x256xf32>
    %cst_8 = arith.constant 0.000000e+00 : f32
    %cst_9 = arith.constant 6.000000e+00 : f32
    %10 = vector.broadcast %cst_8 : f32 to vector<16x256xf32>
    %11 = arith.maximumf %10, %9 : vector<16x256xf32>
    %12 = vector.broadcast %cst_9 : f32 to vector<16x256xf32>
    %13 = arith.minimumf %12, %11 : vector<16x256xf32>
    %cst_10 = arith.constant 0.000000e+00 : f32
    %14 = vector.broadcast %cst_10 : f32 to vector<16x256xf32>
    %15 = vector.extract_strided_slice %13 {offsets = [0, 183], sizes = [16, 73], strides = [1, 1]} : vector<16x256xf32> to vector<16x73xf32>
    %16 = vector.extract_strided_slice %13 {offsets = [0, 0], sizes = [16, 183], strides = [1, 1]} : vector<16x256xf32> to vector<16x183xf32>
    %17 = tpu.concatenate %15, %16 in 1 : vector<16x73xf32>, vector<16x183xf32> -> vector<16x256xf32>
    %c0_11 = arith.constant 0 : index
    %c0_12 = arith.constant 0 : index
    %18 = vector.load %arg5[%c0_11, %c0_12] : memref<16x27xf32, #tpu.memory_space<vmem>>, vector<16x1xf32>
    %19 = vector.broadcast %18 : vector<16x1xf32> to vector<16x256xf32>
    %20 = arith.mulf %17, %19 : vector<16x256xf32>
    %c0_13 = arith.constant 0 : index
    %c0_14 = arith.constant 0 : index
    %21 = vector.load %arg6[%c0_13, %c0_14] : memref<27x256xf32, #tpu.memory_space<vmem>>, vector<1x256xf32>
    %22 = vector.broadcast %21 : vector<1x256xf32> to vector<16x256xf32>
    %23 = arith.mulf %20, %22 : vector<16x256xf32>
    %24 = arith.addf %14, %23 : vector<16x256xf32>
    %25 = vector.extract_strided_slice %13 {offsets = [0, 184], sizes = [16, 72], strides = [1, 1]} : vector<16x256xf32> to vector<16x72xf32>
    %26 = vector.extract_strided_slice %13 {offsets = [0, 0], sizes = [16, 184], strides = [1, 1]} : vector<16x256xf32> to vector<16x184xf32>
    %27 = tpu.concatenate %25, %26 in 1 : vector<16x72xf32>, vector<16x184xf32> -> vector<16x256xf32>
    %c0_15 = arith.constant 0 : index
    %c1 = arith.constant 1 : index
    %28 = vector.load %arg5[%c0_15, %c1] : memref<16x27xf32, #tpu.memory_space<vmem>>, vector<16x1xf32>
    %29 = vector.broadcast %28 : vector<16x1xf32> to vector<16x256xf32>
    %30 = arith.mulf %27, %29 : vector<16x256xf32>
    %c1_16 = arith.constant 1 : index
    %c0_17 = arith.constant 0 : index
    %31 = vector.load %arg6[%c1_16, %c0_17] : memref<27x256xf32, #tpu.memory_space<vmem>>, vector<1x256xf32>
    %32 = vector.broadcast %31 : vector<1x256xf32> to vector<16x256xf32>
    %33 = arith.mulf %30, %32 : vector<16x256xf32>
    %34 = arith.addf %24, %33 : vector<16x256xf32>
    %35 = vector.extract_strided_slice %13 {offsets = [0, 185], sizes = [16, 71], strides = [1, 1]} : vector<16x256xf32> to vector<16x71xf32>
    %36 = vector.extract_strided_slice %13 {offsets = [0, 0], sizes = [16, 185], strides = [1, 1]} : vector<16x256xf32> to vector<16x185xf32>
    %37 = tpu.concatenate %35, %36 in 1 : vector<16x71xf32>, vector<16x185xf32> -> vector<16x256xf32>
    %c0_18 = arith.constant 0 : index
    %c2 = arith.constant 2 : index
    %38 = vector.load %arg5[%c0_18, %c2] : memref<16x27xf32, #tpu.memory_space<vmem>>, vector<16x1xf32>
    %39 = vector.broadcast %38 : vector<16x1xf32> to vector<16x256xf32>
    %40 = arith.mulf %37, %39 : vector<16x256xf32>
    %c2_19 = arith.constant 2 : index
    %c0_20 = arith.constant 0 : index
    %41 = vector.load %arg6[%c2_19, %c0_20] : memref<27x256xf32, #tpu.memory_space<vmem>>, vector<1x256xf32>
    %42 = vector.broadcast %41 : vector<1x256xf32> to vector<16x256xf32>
    %43 = arith.mulf %40, %42 : vector<16x256xf32>
    %44 = arith.addf %34, %43 : vector<16x256xf32>
    %45 = vector.extract_strided_slice %13 {offsets = [0, 191], sizes = [16, 65], strides = [1, 1]} : vector<16x256xf32> to vector<16x65xf32>
    %46 = vector.extract_strided_slice %13 {offsets = [0, 0], sizes = [16, 191], strides = [1, 1]} : vector<16x256xf32> to vector<16x191xf32>
    %47 = tpu.concatenate %45, %46 in 1 : vector<16x65xf32>, vector<16x191xf32> -> vector<16x256xf32>
    %c0_21 = arith.constant 0 : index
    %c3 = arith.constant 3 : index
    %48 = vector.load %arg5[%c0_21, %c3] : memref<16x27xf32, #tpu.memory_space<vmem>>, vector<16x1xf32>
    %49 = vector.broadcast %48 : vector<16x1xf32> to vector<16x256xf32>
    %50 = arith.mulf %47, %49 : vector<16x256xf32>
    %c3_22 = arith.constant 3 : index
    %c0_23 = arith.constant 0 : index
    %51 = vector.load %arg6[%c3_22, %c0_23] : memref<27x256xf32, #tpu.memory_space<vmem>>, vector<1x256xf32>
    %52 = vector.broadcast %51 : vector<1x256xf32> to vector<16x256xf32>
    %53 = arith.mulf %50, %52 : vector<16x256xf32>
    %54 = arith.addf %44, %53 : vector<16x256xf32>
    %55 = vector.extract_strided_slice %13 {offsets = [0, 192], sizes = [16, 64], strides = [1, 1]} : vector<16x256xf32> to vector<16x64xf32>
    %56 = vector.extract_strided_slice %13 {offsets = [0, 0], sizes = [16, 192], strides = [1, 1]} : vector<16x256xf32> to vector<16x192xf32>
    %57 = tpu.concatenate %55, %56 in 1 : vector<16x64xf32>, vector<16x192xf32> -> vector<16x256xf32>
    %c0_24 = arith.constant 0 : index
    %c4 = arith.constant 4 : index
    %58 = vector.load %arg5[%c0_24, %c4] : memref<16x27xf32, #tpu.memory_space<vmem>>, vector<16x1xf32>
    %59 = vector.broadcast %58 : vector<16x1xf32> to vector<16x256xf32>
    %60 = arith.mulf %57, %59 : vector<16x256xf32>
    %c4_25 = arith.constant 4 : index
    %c0_26 = arith.constant 0 : index
    %61 = vector.load %arg6[%c4_25, %c0_26] : memref<27x256xf32, #tpu.memory_space<vmem>>, vector<1x256xf32>
    %62 = vector.broadcast %61 : vector<1x256xf32> to vector<16x256xf32>
    %63 = arith.mulf %60, %62 : vector<16x256xf32>
    %64 = arith.addf %54, %63 : vector<16x256xf32>
    %65 = vector.extract_strided_slice %13 {offsets = [0, 193], sizes = [16, 63], strides = [1, 1]} : vector<16x256xf32> to vector<16x63xf32>
    %66 = vector.extract_strided_slice %13 {offsets = [0, 0], sizes = [16, 193], strides = [1, 1]} : vector<16x256xf32> to vector<16x193xf32>
    %67 = tpu.concatenate %65, %66 in 1 : vector<16x63xf32>, vector<16x193xf32> -> vector<16x256xf32>
    %c0_27 = arith.constant 0 : index
    %c5 = arith.constant 5 : index
    %68 = vector.load %arg5[%c0_27, %c5] : memref<16x27xf32, #tpu.memory_space<vmem>>, vector<16x1xf32>
    %69 = vector.broadcast %68 : vector<16x1xf32> to vector<16x256xf32>
    %70 = arith.mulf %67, %69 : vector<16x256xf32>
    %c5_28 = arith.constant 5 : index
    %c0_29 = arith.constant 0 : index
    %71 = vector.load %arg6[%c5_28, %c0_29] : memref<27x256xf32, #tpu.memory_space<vmem>>, vector<1x256xf32>
    %72 = vector.broadcast %71 : vector<1x256xf32> to vector<16x256xf32>
    %73 = arith.mulf %70, %72 : vector<16x256xf32>
    %74 = arith.addf %64, %73 : vector<16x256xf32>
    %75 = vector.extract_strided_slice %13 {offsets = [0, 199], sizes = [16, 57], strides = [1, 1]} : vector<16x256xf32> to vector<16x57xf32>
    %76 = vector.extract_strided_slice %13 {offsets = [0, 0], sizes = [16, 199], strides = [1, 1]} : vector<16x256xf32> to vector<16x199xf32>
    %77 = tpu.concatenate %75, %76 in 1 : vector<16x57xf32>, vector<16x199xf32> -> vector<16x256xf32>
    %c0_30 = arith.constant 0 : index
    %c6 = arith.constant 6 : index
    %78 = vector.load %arg5[%c0_30, %c6] : memref<16x27xf32, #tpu.memory_space<vmem>>, vector<16x1xf32>
    %79 = vector.broadcast %78 : vector<16x1xf32> to vector<16x256xf32>
    %80 = arith.mulf %77, %79 : vector<16x256xf32>
    %c6_31 = arith.constant 6 : index
    %c0_32 = arith.constant 0 : index
    %81 = vector.load %arg6[%c6_31, %c0_32] : memref<27x256xf32, #tpu.memory_space<vmem>>, vector<1x256xf32>
    %82 = vector.broadcast %81 : vector<1x256xf32> to vector<16x256xf32>
    %83 = arith.mulf %80, %82 : vector<16x256xf32>
    %84 = arith.addf %74, %83 : vector<16x256xf32>
    %85 = vector.extract_strided_slice %13 {offsets = [0, 200], sizes = [16, 56], strides = [1, 1]} : vector<16x256xf32> to vector<16x56xf32>
    %86 = vector.extract_strided_slice %13 {offsets = [0, 0], sizes = [16, 200], strides = [1, 1]} : vector<16x256xf32> to vector<16x200xf32>
    %87 = tpu.concatenate %85, %86 in 1 : vector<16x56xf32>, vector<16x200xf32> -> vector<16x256xf32>
    %c0_33 = arith.constant 0 : index
    %c7 = arith.constant 7 : index
    %88 = vector.load %arg5[%c0_33, %c7] : memref<16x27xf32, #tpu.memory_space<vmem>>, vector<16x1xf32>
    %89 = vector.broadcast %88 : vector<16x1xf32> to vector<16x256xf32>
    %90 = arith.mulf %87, %89 : vector<16x256xf32>
    %c7_34 = arith.constant 7 : index
    %c0_35 = arith.constant 0 : index
    %91 = vector.load %arg6[%c7_34, %c0_35] : memref<27x256xf32, #tpu.memory_space<vmem>>, vector<1x256xf32>
    %92 = vector.broadcast %91 : vector<1x256xf32> to vector<16x256xf32>
    %93 = arith.mulf %90, %92 : vector<16x256xf32>
    %94 = arith.addf %84, %93 : vector<16x256xf32>
    %95 = vector.extract_strided_slice %13 {offsets = [0, 201], sizes = [16, 55], strides = [1, 1]} : vector<16x256xf32> to vector<16x55xf32>
    %96 = vector.extract_strided_slice %13 {offsets = [0, 0], sizes = [16, 201], strides = [1, 1]} : vector<16x256xf32> to vector<16x201xf32>
    %97 = tpu.concatenate %95, %96 in 1 : vector<16x55xf32>, vector<16x201xf32> -> vector<16x256xf32>
    %c0_36 = arith.constant 0 : index
    %c8 = arith.constant 8 : index
    %98 = vector.load %arg5[%c0_36, %c8] : memref<16x27xf32, #tpu.memory_space<vmem>>, vector<16x1xf32>
    %99 = vector.broadcast %98 : vector<16x1xf32> to vector<16x256xf32>
    %100 = arith.mulf %97, %99 : vector<16x256xf32>
    %c8_37 = arith.constant 8 : index
    %c0_38 = arith.constant 0 : index
    %101 = vector.load %arg6[%c8_37, %c0_38] : memref<27x256xf32, #tpu.memory_space<vmem>>, vector<1x256xf32>
    %102 = vector.broadcast %101 : vector<1x256xf32> to vector<16x256xf32>
    %103 = arith.mulf %100, %102 : vector<16x256xf32>
    %104 = arith.addf %94, %103 : vector<16x256xf32>
    %105 = vector.extract_strided_slice %13 {offsets = [0, 247], sizes = [16, 9], strides = [1, 1]} : vector<16x256xf32> to vector<16x9xf32>
    %106 = vector.extract_strided_slice %13 {offsets = [0, 0], sizes = [16, 247], strides = [1, 1]} : vector<16x256xf32> to vector<16x247xf32>
    %107 = tpu.concatenate %105, %106 in 1 : vector<16x9xf32>, vector<16x247xf32> -> vector<16x256xf32>
    %c0_39 = arith.constant 0 : index
    %c9 = arith.constant 9 : index
    %108 = vector.load %arg5[%c0_39, %c9] : memref<16x27xf32, #tpu.memory_space<vmem>>, vector<16x1xf32>
    %109 = vector.broadcast %108 : vector<16x1xf32> to vector<16x256xf32>
    %110 = arith.mulf %107, %109 : vector<16x256xf32>
    %c9_40 = arith.constant 9 : index
    %c0_41 = arith.constant 0 : index
    %111 = vector.load %arg6[%c9_40, %c0_41] : memref<27x256xf32, #tpu.memory_space<vmem>>, vector<1x256xf32>
    %112 = vector.broadcast %111 : vector<1x256xf32> to vector<16x256xf32>
    %113 = arith.mulf %110, %112 : vector<16x256xf32>
    %114 = arith.addf %104, %113 : vector<16x256xf32>
    %115 = vector.extract_strided_slice %13 {offsets = [0, 248], sizes = [16, 8], strides = [1, 1]} : vector<16x256xf32> to vector<16x8xf32>
    %116 = vector.extract_strided_slice %13 {offsets = [0, 0], sizes = [16, 248], strides = [1, 1]} : vector<16x256xf32> to vector<16x248xf32>
    %117 = tpu.concatenate %115, %116 in 1 : vector<16x8xf32>, vector<16x248xf32> -> vector<16x256xf32>
    %c0_42 = arith.constant 0 : index
    %c10 = arith.constant 10 : index
    %118 = vector.load %arg5[%c0_42, %c10] : memref<16x27xf32, #tpu.memory_space<vmem>>, vector<16x1xf32>
    %119 = vector.broadcast %118 : vector<16x1xf32> to vector<16x256xf32>
    %120 = arith.mulf %117, %119 : vector<16x256xf32>
    %c10_43 = arith.constant 10 : index
    %c0_44 = arith.constant 0 : index
    %121 = vector.load %arg6[%c10_43, %c0_44] : memref<27x256xf32, #tpu.memory_space<vmem>>, vector<1x256xf32>
    %122 = vector.broadcast %121 : vector<1x256xf32> to vector<16x256xf32>
    %123 = arith.mulf %120, %122 : vector<16x256xf32>
    %124 = arith.addf %114, %123 : vector<16x256xf32>
    %125 = vector.extract_strided_slice %13 {offsets = [0, 249], sizes = [16, 7], strides = [1, 1]} : vector<16x256xf32> to vector<16x7xf32>
    %126 = vector.extract_strided_slice %13 {offsets = [0, 0], sizes = [16, 249], strides = [1, 1]} : vector<16x256xf32> to vector<16x249xf32>
    %127 = tpu.concatenate %125, %126 in 1 : vector<16x7xf32>, vector<16x249xf32> -> vector<16x256xf32>
    %c0_45 = arith.constant 0 : index
    %c11 = arith.constant 11 : index
    %128 = vector.load %arg5[%c0_45, %c11] : memref<16x27xf32, #tpu.memory_space<vmem>>, vector<16x1xf32>
    %129 = vector.broadcast %128 : vector<16x1xf32> to vector<16x256xf32>
    %130 = arith.mulf %127, %129 : vector<16x256xf32>
    %c11_46 = arith.constant 11 : index
    %c0_47 = arith.constant 0 : index
    %131 = vector.load %arg6[%c11_46, %c0_47] : memref<27x256xf32, #tpu.memory_space<vmem>>, vector<1x256xf32>
    %132 = vector.broadcast %131 : vector<1x256xf32> to vector<16x256xf32>
    %133 = arith.mulf %130, %132 : vector<16x256xf32>
    %134 = arith.addf %124, %133 : vector<16x256xf32>
    %135 = vector.extract_strided_slice %13 {offsets = [0, 255], sizes = [16, 1], strides = [1, 1]} : vector<16x256xf32> to vector<16x1xf32>
    %136 = vector.extract_strided_slice %13 {offsets = [0, 0], sizes = [16, 255], strides = [1, 1]} : vector<16x256xf32> to vector<16x255xf32>
    %137 = tpu.concatenate %135, %136 in 1 : vector<16x1xf32>, vector<16x255xf32> -> vector<16x256xf32>
    %c0_48 = arith.constant 0 : index
    %c12 = arith.constant 12 : index
    %138 = vector.load %arg5[%c0_48, %c12] : memref<16x27xf32, #tpu.memory_space<vmem>>, vector<16x1xf32>
    %139 = vector.broadcast %138 : vector<16x1xf32> to vector<16x256xf32>
    %140 = arith.mulf %137, %139 : vector<16x256xf32>
    %c12_49 = arith.constant 12 : index
    %c0_50 = arith.constant 0 : index
    %141 = vector.load %arg6[%c12_49, %c0_50] : memref<27x256xf32, #tpu.memory_space<vmem>>, vector<1x256xf32>
    %142 = vector.broadcast %141 : vector<1x256xf32> to vector<16x256xf32>
    %143 = arith.mulf %140, %142 : vector<16x256xf32>
    %144 = arith.addf %134, %143 : vector<16x256xf32>
    %c0_51 = arith.constant 0 : index
    %c13 = arith.constant 13 : index
    %145 = vector.load %arg5[%c0_51, %c13] : memref<16x27xf32, #tpu.memory_space<vmem>>, vector<16x1xf32>
    %146 = vector.broadcast %145 : vector<16x1xf32> to vector<16x256xf32>
    %147 = arith.mulf %13, %146 : vector<16x256xf32>
    %148 = arith.addf %144, %147 : vector<16x256xf32>
    %149 = vector.extract_strided_slice %13 {offsets = [0, 1], sizes = [16, 255], strides = [1, 1]} : vector<16x256xf32> to vector<16x255xf32>
    %150 = vector.extract_strided_slice %13 {offsets = [0, 0], sizes = [16, 1], strides = [1, 1]} : vector<16x256xf32> to vector<16x1xf32>
    %151 = tpu.concatenate %149, %150 in 1 : vector<16x255xf32>, vector<16x1xf32> -> vector<16x256xf32>
    %c0_52 = arith.constant 0 : index
    %c14 = arith.constant 14 : index
    %152 = vector.load %arg5[%c0_52, %c14] : memref<16x27xf32, #tpu.memory_space<vmem>>, vector<16x1xf32>
    %153 = vector.broadcast %152 : vector<16x1xf32> to vector<16x256xf32>
    %154 = arith.mulf %151, %153 : vector<16x256xf32>
    %c14_53 = arith.constant 14 : index
    %c0_54 = arith.constant 0 : index
    %155 = vector.load %arg6[%c14_53, %c0_54] : memref<27x256xf32, #tpu.memory_space<vmem>>, vector<1x256xf32>
    %156 = vector.broadcast %155 : vector<1x256xf32> to vector<16x256xf32>
    %157 = arith.mulf %154, %156 : vector<16x256xf32>
    %158 = arith.addf %148, %157 : vector<16x256xf32>
    %159 = vector.extract_strided_slice %13 {offsets = [0, 7], sizes = [16, 249], strides = [1, 1]} : vector<16x256xf32> to vector<16x249xf32>
    %160 = vector.extract_strided_slice %13 {offsets = [0, 0], sizes = [16, 7], strides = [1, 1]} : vector<16x256xf32> to vector<16x7xf32>
    %161 = tpu.concatenate %159, %160 in 1 : vector<16x249xf32>, vector<16x7xf32> -> vector<16x256xf32>
    %c0_55 = arith.constant 0 : index
    %c15 = arith.constant 15 : index
    %162 = vector.load %arg5[%c0_55, %c15] : memref<16x27xf32, #tpu.memory_space<vmem>>, vector<16x1xf32>
    %163 = vector.broadcast %162 : vector<16x1xf32> to vector<16x256xf32>
    %164 = arith.mulf %161, %163 : vector<16x256xf32>
    %c15_56 = arith.constant 15 : index
    %c0_57 = arith.constant 0 : index
    %165 = vector.load %arg6[%c15_56, %c0_57] : memref<27x256xf32, #tpu.memory_space<vmem>>, vector<1x256xf32>
    %166 = vector.broadcast %165 : vector<1x256xf32> to vector<16x256xf32>
    %167 = arith.mulf %164, %166 : vector<16x256xf32>
    %168 = arith.addf %158, %167 : vector<16x256xf32>
    %169 = vector.extract_strided_slice %13 {offsets = [0, 8], sizes = [16, 248], strides = [1, 1]} : vector<16x256xf32> to vector<16x248xf32>
    %170 = vector.extract_strided_slice %13 {offsets = [0, 0], sizes = [16, 8], strides = [1, 1]} : vector<16x256xf32> to vector<16x8xf32>
    %171 = tpu.concatenate %169, %170 in 1 : vector<16x248xf32>, vector<16x8xf32> -> vector<16x256xf32>
    %c0_58 = arith.constant 0 : index
    %c16 = arith.constant 16 : index
    %172 = vector.load %arg5[%c0_58, %c16] : memref<16x27xf32, #tpu.memory_space<vmem>>, vector<16x1xf32>
    %173 = vector.broadcast %172 : vector<16x1xf32> to vector<16x256xf32>
    %174 = arith.mulf %171, %173 : vector<16x256xf32>
    %c16_59 = arith.constant 16 : index
    %c0_60 = arith.constant 0 : index
    %175 = vector.load %arg6[%c16_59, %c0_60] : memref<27x256xf32, #tpu.memory_space<vmem>>, vector<1x256xf32>
    %176 = vector.broadcast %175 : vector<1x256xf32> to vector<16x256xf32>
    %177 = arith.mulf %174, %176 : vector<16x256xf32>
    %178 = arith.addf %168, %177 : vector<16x256xf32>
    %179 = vector.extract_strided_slice %13 {offsets = [0, 9], sizes = [16, 247], strides = [1, 1]} : vector<16x256xf32> to vector<16x247xf32>
    %180 = vector.extract_strided_slice %13 {offsets = [0, 0], sizes = [16, 9], strides = [1, 1]} : vector<16x256xf32> to vector<16x9xf32>
    %181 = tpu.concatenate %179, %180 in 1 : vector<16x247xf32>, vector<16x9xf32> -> vector<16x256xf32>
    %c0_61 = arith.constant 0 : index
    %c17 = arith.constant 17 : index
    %182 = vector.load %arg5[%c0_61, %c17] : memref<16x27xf32, #tpu.memory_space<vmem>>, vector<16x1xf32>
    %183 = vector.broadcast %182 : vector<16x1xf32> to vector<16x256xf32>
    %184 = arith.mulf %181, %183 : vector<16x256xf32>
    %c17_62 = arith.constant 17 : index
    %c0_63 = arith.constant 0 : index
    %185 = vector.load %arg6[%c17_62, %c0_63] : memref<27x256xf32, #tpu.memory_space<vmem>>, vector<1x256xf32>
    %186 = vector.broadcast %185 : vector<1x256xf32> to vector<16x256xf32>
    %187 = arith.mulf %184, %186 : vector<16x256xf32>
    %188 = arith.addf %178, %187 : vector<16x256xf32>
    %189 = vector.extract_strided_slice %13 {offsets = [0, 55], sizes = [16, 201], strides = [1, 1]} : vector<16x256xf32> to vector<16x201xf32>
    %190 = vector.extract_strided_slice %13 {offsets = [0, 0], sizes = [16, 55], strides = [1, 1]} : vector<16x256xf32> to vector<16x55xf32>
    %191 = tpu.concatenate %189, %190 in 1 : vector<16x201xf32>, vector<16x55xf32> -> vector<16x256xf32>
    %c0_64 = arith.constant 0 : index
    %c18 = arith.constant 18 : index
    %192 = vector.load %arg5[%c0_64, %c18] : memref<16x27xf32, #tpu.memory_space<vmem>>, vector<16x1xf32>
    %193 = vector.broadcast %192 : vector<16x1xf32> to vector<16x256xf32>
    %194 = arith.mulf %191, %193 : vector<16x256xf32>
    %c18_65 = arith.constant 18 : index
    %c0_66 = arith.constant 0 : index
    %195 = vector.load %arg6[%c18_65, %c0_66] : memref<27x256xf32, #tpu.memory_space<vmem>>, vector<1x256xf32>
    %196 = vector.broadcast %195 : vector<1x256xf32> to vector<16x256xf32>
    %197 = arith.mulf %194, %196 : vector<16x256xf32>
    %198 = arith.addf %188, %197 : vector<16x256xf32>
    %199 = vector.extract_strided_slice %13 {offsets = [0, 56], sizes = [16, 200], strides = [1, 1]} : vector<16x256xf32> to vector<16x200xf32>
    %200 = vector.extract_strided_slice %13 {offsets = [0, 0], sizes = [16, 56], strides = [1, 1]} : vector<16x256xf32> to vector<16x56xf32>
    %201 = tpu.concatenate %199, %200 in 1 : vector<16x200xf32>, vector<16x56xf32> -> vector<16x256xf32>
    %c0_67 = arith.constant 0 : index
    %c19 = arith.constant 19 : index
    %202 = vector.load %arg5[%c0_67, %c19] : memref<16x27xf32, #tpu.memory_space<vmem>>, vector<16x1xf32>
    %203 = vector.broadcast %202 : vector<16x1xf32> to vector<16x256xf32>
    %204 = arith.mulf %201, %203 : vector<16x256xf32>
    %c19_68 = arith.constant 19 : index
    %c0_69 = arith.constant 0 : index
    %205 = vector.load %arg6[%c19_68, %c0_69] : memref<27x256xf32, #tpu.memory_space<vmem>>, vector<1x256xf32>
    %206 = vector.broadcast %205 : vector<1x256xf32> to vector<16x256xf32>
    %207 = arith.mulf %204, %206 : vector<16x256xf32>
    %208 = arith.addf %198, %207 : vector<16x256xf32>
    %209 = vector.extract_strided_slice %13 {offsets = [0, 57], sizes = [16, 199], strides = [1, 1]} : vector<16x256xf32> to vector<16x199xf32>
    %210 = vector.extract_strided_slice %13 {offsets = [0, 0], sizes = [16, 57], strides = [1, 1]} : vector<16x256xf32> to vector<16x57xf32>
    %211 = tpu.concatenate %209, %210 in 1 : vector<16x199xf32>, vector<16x57xf32> -> vector<16x256xf32>
    %c0_70 = arith.constant 0 : index
    %c20 = arith.constant 20 : index
    %212 = vector.load %arg5[%c0_70, %c20] : memref<16x27xf32, #tpu.memory_space<vmem>>, vector<16x1xf32>
    %213 = vector.broadcast %212 : vector<16x1xf32> to vector<16x256xf32>
    %214 = arith.mulf %211, %213 : vector<16x256xf32>
    %c20_71 = arith.constant 20 : index
    %c0_72 = arith.constant 0 : index
    %215 = vector.load %arg6[%c20_71, %c0_72] : memref<27x256xf32, #tpu.memory_space<vmem>>, vector<1x256xf32>
    %216 = vector.broadcast %215 : vector<1x256xf32> to vector<16x256xf32>
    %217 = arith.mulf %214, %216 : vector<16x256xf32>
    %218 = arith.addf %208, %217 : vector<16x256xf32>
    %219 = vector.extract_strided_slice %13 {offsets = [0, 63], sizes = [16, 193], strides = [1, 1]} : vector<16x256xf32> to vector<16x193xf32>
    %220 = vector.extract_strided_slice %13 {offsets = [0, 0], sizes = [16, 63], strides = [1, 1]} : vector<16x256xf32> to vector<16x63xf32>
    %221 = tpu.concatenate %219, %220 in 1 : vector<16x193xf32>, vector<16x63xf32> -> vector<16x256xf32>
    %c0_73 = arith.constant 0 : index
    %c21 = arith.constant 21 : index
    %222 = vector.load %arg5[%c0_73, %c21] : memref<16x27xf32, #tpu.memory_space<vmem>>, vector<16x1xf32>
    %223 = vector.broadcast %222 : vector<16x1xf32> to vector<16x256xf32>
    %224 = arith.mulf %221, %223 : vector<16x256xf32>
    %c21_74 = arith.constant 21 : index
    %c0_75 = arith.constant 0 : index
    %225 = vector.load %arg6[%c21_74, %c0_75] : memref<27x256xf32, #tpu.memory_space<vmem>>, vector<1x256xf32>
    %226 = vector.broadcast %225 : vector<1x256xf32> to vector<16x256xf32>
    %227 = arith.mulf %224, %226 : vector<16x256xf32>
    %228 = arith.addf %218, %227 : vector<16x256xf32>
    %229 = vector.extract_strided_slice %13 {offsets = [0, 64], sizes = [16, 192], strides = [1, 1]} : vector<16x256xf32> to vector<16x192xf32>
    %230 = vector.extract_strided_slice %13 {offsets = [0, 0], sizes = [16, 64], strides = [1, 1]} : vector<16x256xf32> to vector<16x64xf32>
    %231 = tpu.concatenate %229, %230 in 1 : vector<16x192xf32>, vector<16x64xf32> -> vector<16x256xf32>
    %c0_76 = arith.constant 0 : index
    %c22 = arith.constant 22 : index
    %232 = vector.load %arg5[%c0_76, %c22] : memref<16x27xf32, #tpu.memory_space<vmem>>, vector<16x1xf32>
    %233 = vector.broadcast %232 : vector<16x1xf32> to vector<16x256xf32>
    %234 = arith.mulf %231, %233 : vector<16x256xf32>
    %c22_77 = arith.constant 22 : index
    %c0_78 = arith.constant 0 : index
    %235 = vector.load %arg6[%c22_77, %c0_78] : memref<27x256xf32, #tpu.memory_space<vmem>>, vector<1x256xf32>
    %236 = vector.broadcast %235 : vector<1x256xf32> to vector<16x256xf32>
    %237 = arith.mulf %234, %236 : vector<16x256xf32>
    %238 = arith.addf %228, %237 : vector<16x256xf32>
    %239 = vector.extract_strided_slice %13 {offsets = [0, 65], sizes = [16, 191], strides = [1, 1]} : vector<16x256xf32> to vector<16x191xf32>
    %240 = vector.extract_strided_slice %13 {offsets = [0, 0], sizes = [16, 65], strides = [1, 1]} : vector<16x256xf32> to vector<16x65xf32>
    %241 = tpu.concatenate %239, %240 in 1 : vector<16x191xf32>, vector<16x65xf32> -> vector<16x256xf32>
    %c0_79 = arith.constant 0 : index
    %c23 = arith.constant 23 : index
    %242 = vector.load %arg5[%c0_79, %c23] : memref<16x27xf32, #tpu.memory_space<vmem>>, vector<16x1xf32>
    %243 = vector.broadcast %242 : vector<16x1xf32> to vector<16x256xf32>
    %244 = arith.mulf %241, %243 : vector<16x256xf32>
    %c23_80 = arith.constant 23 : index
    %c0_81 = arith.constant 0 : index
    %245 = vector.load %arg6[%c23_80, %c0_81] : memref<27x256xf32, #tpu.memory_space<vmem>>, vector<1x256xf32>
    %246 = vector.broadcast %245 : vector<1x256xf32> to vector<16x256xf32>
    %247 = arith.mulf %244, %246 : vector<16x256xf32>
    %248 = arith.addf %238, %247 : vector<16x256xf32>
    %249 = vector.extract_strided_slice %13 {offsets = [0, 71], sizes = [16, 185], strides = [1, 1]} : vector<16x256xf32> to vector<16x185xf32>
    %250 = vector.extract_strided_slice %13 {offsets = [0, 0], sizes = [16, 71], strides = [1, 1]} : vector<16x256xf32> to vector<16x71xf32>
    %251 = tpu.concatenate %249, %250 in 1 : vector<16x185xf32>, vector<16x71xf32> -> vector<16x256xf32>
    %c0_82 = arith.constant 0 : index
    %c24 = arith.constant 24 : index
    %252 = vector.load %arg5[%c0_82, %c24] : memref<16x27xf32, #tpu.memory_space<vmem>>, vector<16x1xf32>
    %253 = vector.broadcast %252 : vector<16x1xf32> to vector<16x256xf32>
    %254 = arith.mulf %251, %253 : vector<16x256xf32>
    %c24_83 = arith.constant 24 : index
    %c0_84 = arith.constant 0 : index
    %255 = vector.load %arg6[%c24_83, %c0_84] : memref<27x256xf32, #tpu.memory_space<vmem>>, vector<1x256xf32>
    %256 = vector.broadcast %255 : vector<1x256xf32> to vector<16x256xf32>
    %257 = arith.mulf %254, %256 : vector<16x256xf32>
    %258 = arith.addf %248, %257 : vector<16x256xf32>
    %259 = vector.extract_strided_slice %13 {offsets = [0, 72], sizes = [16, 184], strides = [1, 1]} : vector<16x256xf32> to vector<16x184xf32>
    %260 = vector.extract_strided_slice %13 {offsets = [0, 0], sizes = [16, 72], strides = [1, 1]} : vector<16x256xf32> to vector<16x72xf32>
    %261 = tpu.concatenate %259, %260 in 1 : vector<16x184xf32>, vector<16x72xf32> -> vector<16x256xf32>
    %c0_85 = arith.constant 0 : index
    %c25 = arith.constant 25 : index
    %262 = vector.load %arg5[%c0_85, %c25] : memref<16x27xf32, #tpu.memory_space<vmem>>, vector<16x1xf32>
    %263 = vector.broadcast %262 : vector<16x1xf32> to vector<16x256xf32>
    %264 = arith.mulf %261, %263 : vector<16x256xf32>
    %c25_86 = arith.constant 25 : index
    %c0_87 = arith.constant 0 : index
    %265 = vector.load %arg6[%c25_86, %c0_87] : memref<27x256xf32, #tpu.memory_space<vmem>>, vector<1x256xf32>
    %266 = vector.broadcast %265 : vector<1x256xf32> to vector<16x256xf32>
    %267 = arith.mulf %264, %266 : vector<16x256xf32>
    %268 = arith.addf %258, %267 : vector<16x256xf32>
    %269 = vector.extract_strided_slice %13 {offsets = [0, 73], sizes = [16, 183], strides = [1, 1]} : vector<16x256xf32> to vector<16x183xf32>
    %270 = vector.extract_strided_slice %13 {offsets = [0, 0], sizes = [16, 73], strides = [1, 1]} : vector<16x256xf32> to vector<16x73xf32>
    %271 = tpu.concatenate %269, %270 in 1 : vector<16x183xf32>, vector<16x73xf32> -> vector<16x256xf32>
    %c0_88 = arith.constant 0 : index
    %c26 = arith.constant 26 : index
    %272 = vector.load %arg5[%c0_88, %c26] : memref<16x27xf32, #tpu.memory_space<vmem>>, vector<16x1xf32>
    %273 = vector.broadcast %272 : vector<16x1xf32> to vector<16x256xf32>
    %274 = arith.mulf %271, %273 : vector<16x256xf32>
    %c26_89 = arith.constant 26 : index
    %c0_90 = arith.constant 0 : index
    %275 = vector.load %arg6[%c26_89, %c0_90] : memref<27x256xf32, #tpu.memory_space<vmem>>, vector<1x256xf32>
    %276 = vector.broadcast %275 : vector<1x256xf32> to vector<16x256xf32>
    %277 = arith.mulf %274, %276 : vector<16x256xf32>
    %278 = arith.addf %268, %277 : vector<16x256xf32>
    %c0_91 = arith.constant 0 : index
    %c0_92 = arith.constant 0 : index
    %279 = vector.load %arg7[%c0_91, %c0_92] : memref<16x1xf32, #tpu.memory_space<vmem>>, vector<16x1xf32>
    %280 = vector.broadcast %279 : vector<16x1xf32> to vector<16x256xf32>
    %281 = arith.mulf %278, %280 : vector<16x256xf32>
    %c0_93 = arith.constant 0 : index
    %c0_94 = arith.constant 0 : index
    %282 = vector.load %arg8[%c0_93, %c0_94] : memref<16x1xf32, #tpu.memory_space<vmem>>, vector<16x1xf32>
    %283 = vector.broadcast %282 : vector<16x1xf32> to vector<16x256xf32>
    %284 = arith.addf %281, %283 : vector<16x256xf32>
    %cst_95 = arith.constant 0.000000e+00 : f32
    %cst_96 = arith.constant 6.000000e+00 : f32
    %285 = vector.broadcast %cst_95 : f32 to vector<16x256xf32>
    %286 = arith.maximumf %285, %284 : vector<16x256xf32>
    %287 = vector.broadcast %cst_96 : f32 to vector<16x256xf32>
    %288 = arith.minimumf %287, %286 : vector<16x256xf32>
    %c0_97 = arith.constant 0 : index
    %c0_98 = arith.constant 0 : index
    %289 = vector.load %arg9[%c0_97, %c0_98] : memref<8x16xbf16, #tpu.memory_space<vmem>>, vector<8x16xbf16>
    %290 = arith.extf %289 : vector<8x16xbf16> to vector<8x16xf32>
    %cst_99 = arith.constant dense<0.000000e+00> : vector<8x256xf32>
    %291 = tpu.matmul %290, %288, %cst_99 {dimension_numbers = #tpu.dot_dimension_numbers<[1], [0], [0], [1], [0, 0, 1, 1], [], []>} : vector<8x16xf32>, vector<16x256xf32>, vector<8x256xf32> -> vector<8x256xf32>
    %c0_100 = arith.constant 0 : index
    %c0_101 = arith.constant 0 : index
    %292 = vector.load %arg10[%c0_100, %c0_101] : memref<8x1xf32, #tpu.memory_space<vmem>>, vector<8x1xf32>
    %293 = vector.broadcast %292 : vector<8x1xf32> to vector<8x256xf32>
    %294 = arith.mulf %291, %293 : vector<8x256xf32>
    %c0_102 = arith.constant 0 : index
    %c0_103 = arith.constant 0 : index
    %295 = vector.load %arg11[%c0_102, %c0_103] : memref<8x1xf32, #tpu.memory_space<vmem>>, vector<8x1xf32>
    %296 = vector.broadcast %295 : vector<8x1xf32> to vector<8x256xf32>
    %297 = arith.addf %294, %296 : vector<8x256xf32>
    %298 = arith.extf %1 : vector<8x256xbf16> to vector<8x256xf32>
    %299 = arith.addf %297, %298 : vector<8x256xf32>
    %c0_104 = arith.constant 0 : index
    %c0_105 = arith.constant 0 : index
    %c0_106 = arith.constant 0 : index
    %300 = vector.load %arg12[%c0_104, %c0_105, %c0_106] : memref<1x8x256xf32, #tpu.memory_space<vmem>>, vector<1x8x256xf32>
    %301 = vector.shape_cast %300 : vector<1x8x256xf32> to vector<8x256xf32>
    %302 = vector.shape_cast %299 : vector<8x256xf32> to vector<1x8x256xf32>
    tpu.vector_store %arg12[%c0_104, %c0_105, %c0_106], %302 {strides = array<i32>} : memref<1x8x256xf32, #tpu.memory_space<vmem>>, vector<1x8x256xf32>,
    return
  }
  func.func @transform_0(%arg0: i32) -> (i32, i32, i32) {
    %c0_i32 = arith.constant 0 : i32
    %c0_i32_0 = arith.constant 0 : i32
    %c0_i32_1 = arith.constant 0 : i32
    return %arg0, %c0_i32, %c0_i32_0 : i32, i32, i32
  }
  func.func @transform_1(%arg0: i32) -> (i32, i32) {
    %c0_i32 = arith.constant 0 : i32
    %c0_i32_0 = arith.constant 0 : i32
    %c0_i32_1 = arith.constant 0 : i32
    return %c0_i32, %c0_i32_0 : i32, i32
  }
  func.func @transform_2(%arg0: i32) -> (i32, i32) {
    %c0_i32 = arith.constant 0 : i32
    %c0_i32_0 = arith.constant 0 : i32
    %c0_i32_1 = arith.constant 0 : i32
    return %c0_i32, %c0_i32_0 : i32, i32
  }
  func.func @transform_3(%arg0: i32) -> (i32, i32) {
    %c0_i32 = arith.constant 0 : i32
    %c0_i32_0 = arith.constant 0 : i32
    %c0_i32_1 = arith.constant 0 : i32
    return %c0_i32, %c0_i32_0 : i32, i32
  }
  func.func @transform_4(%arg0: i32) -> (i32, i32) {
    %c0_i32 = arith.constant 0 : i32
    %c0_i32_0 = arith.constant 0 : i32
    %c0_i32_1 = arith.constant 0 : i32
    return %c0_i32, %c0_i32_0 : i32, i32
  }
  func.func @transform_5(%arg0: i32) -> (i32, i32) {
    %c0_i32 = arith.constant 0 : i32
    %c0_i32_0 = arith.constant 0 : i32
    %c0_i32_1 = arith.constant 0 : i32
    return %c0_i32, %c0_i32_0 : i32, i32
  }
  func.func @transform_6(%arg0: i32) -> (i32, i32) {
    %c0_i32 = arith.constant 0 : i32
    %c0_i32_0 = arith.constant 0 : i32
    %c0_i32_1 = arith.constant 0 : i32
    return %c0_i32, %c0_i32_0 : i32, i32
  }
  func.func @transform_7(%arg0: i32) -> (i32, i32) {
    %c0_i32 = arith.constant 0 : i32
    %c0_i32_0 = arith.constant 0 : i32
    %c0_i32_1 = arith.constant 0 : i32
    return %c0_i32, %c0_i32_0 : i32, i32
  }
  func.func @transform_8(%arg0: i32) -> (i32, i32) {
    %c0_i32 = arith.constant 0 : i32
    %c0_i32_0 = arith.constant 0 : i32
    %c0_i32_1 = arith.constant 0 : i32
    return %c0_i32, %c0_i32_0 : i32, i32
  }
  func.func @transform_9(%arg0: i32) -> (i32, i32) {
    %c0_i32 = arith.constant 0 : i32
    %c0_i32_0 = arith.constant 0 : i32
    %c0_i32_1 = arith.constant 0 : i32
    return %c0_i32, %c0_i32_0 : i32, i32
  }
  func.func @transform_10(%arg0: i32) -> (i32, i32) {
    %c0_i32 = arith.constant 0 : i32
    %c0_i32_0 = arith.constant 0 : i32
    %c0_i32_1 = arith.constant 0 : i32
    return %c0_i32, %c0_i32_0 : i32, i32
  }
  func.func @transform_11(%arg0: i32) -> (i32, i32, i32) {
    %c0_i32 = arith.constant 0 : i32
    %c0_i32_0 = arith.constant 0 : i32
    %c0_i32_1 = arith.constant 0 : i32
    return %arg0, %c0_i32, %c0_i32_0 : i32, i32, i32
  }
}

</mosaic_0001>

<llo_original>
// kernel: tpu_custom_call.1
$region0: #{tpu_custom_call.1}
  #allocation0 [shape = 'u32[]', space=smem, size = 0x4, offset = 0x4, fixed_abs, tag = 'smem constant byte address 0x4 - core index']
  #allocation1 [shape = 'u32[72,128]{1,0:T(1,128)}', space=vmem, size = 0x9000, scoped, tag = 'internal scratch']
  %s0 = inlined_call_operand.vmem [shape: bf16[2,8,256], index: 0, kind: input, shape index: {}]
  %s1 = inlined_call_operand.vmem [shape: bf16[16,8], index: 1, kind: input, shape index: {}]
  %s2 = inlined_call_operand.vmem [shape: f32[16,1], index: 2, kind: input, shape index: {}]
  %s3 = inlined_call_operand.vmem [shape: f32[16,1], index: 3, kind: input, shape index: {}]
  %s4 = inlined_call_operand.vmem [shape: f32[16,27], index: 4, kind: input, shape index: {}]
  %s5 = inlined_call_operand.hbm [shape: f32[27,256], index: 5, kind: input, shape index: {}]
  %s6 = inlined_call_operand.vmem [shape: f32[16,1], index: 6, kind: input, shape index: {}]
  %s7 = inlined_call_operand.vmem [shape: f32[16,1], index: 7, kind: input, shape index: {}]
  %s8 = inlined_call_operand.vmem [shape: bf16[8,16], index: 8, kind: input, shape index: {}]
  %s9 = inlined_call_operand.vmem [shape: f32[8,1], index: 9, kind: input, shape index: {}]
  %s10 = inlined_call_operand.vmem [shape: f32[8,1], index: 10, kind: input, shape index: {}]
  %s11 = inlined_call_operand.hbm [shape: f32[2,8,256], index: 11, kind: output, shape index: {}]
  %s12 = sld [smem:[#allocation0]]
  $region81: #{tpu_custom_call.1} parent=0
    _
  %s14 = ssub.s32 1, %s12
  %s15 = scalar_select 0, %s14, %s12
  $region1: #{tpu_custom_call.1} parent=0
    #allocation2 [shape = 'u8[32768]{0}', space=vmem, size = 0x8000, scoped, tag = 'input window, operand 5, single buffered']
    #allocation3 [shape = 's32[2]{0}', space=sflag, size = 0x8, scoped, tag = 'scoped memory for tpu_custom_call.1']
    #allocation4 [shape = 's32[2]{0}', space=sflag, size = 0x8, scoped, tag = 'scoped memory for tpu_custom_call.1']
    #allocation5 [shape = 'u8[16384]{0}', space=vmem, size = 0x4000, scoped, tag = 'output window, operand 0']
    %16 = vsyncpa [#allocation3], 0
    %17 = vsyncpa [#allocation4], 0
    %s18 = scalar_lea.sflag [#allocation4], 1
    %19 = vsyncpa %s18, 0
    loop: start=0, step=1, limit=4
    $region2: #{tpu_custom_call.1} parent=1 // loop_pre_header
      _
    $region3: #{tpu_custom_call.1} parent=1 // loop_header
      %s21 = sphi 0, %s25
      %p22 = scmp.ge.s32.totalorder %s21, 4
      %s31 = sphi 0, %s33
      %s34 = sphi 0, %s31
      %s35 = sphi 0, %s34
      %s51 = sphi 0, %s35
      %s55 = sphi 0, %s55
      %s57 = sphi 0, %s55
      %s58 = sphi 0, %s57
      %s72 = sphi 0, %s58
      %s76 = sphi 0, %s76
      %s78 = sphi 0, %s76
      %s79 = sphi 0, %s78
      %s93 = sphi 0, %s79
      %s97 = sphi 0, %s97
      %s99 = sphi 0, %s97
      %s100 = sphi 0, %s99
      %s114 = sphi 0, %s100
      %s118 = sphi 0, %s118
      %s120 = sphi 0, %s118
      %s121 = sphi 0, %s120
      %s135 = sphi 0, %s121
      %s139 = sphi 0, %s139
      %s141 = sphi 0, %s139
      %s142 = sphi 0, %s141
      %s156 = sphi 0, %s142
      %s160 = sphi 0, %s160
      %s162 = sphi 0, %s160
      %s163 = sphi 0, %s162
      %s177 = sphi 0, %s163
      %s181 = sphi 0, %s181
      %s183 = sphi 0, %s181
      %s184 = sphi 0, %s183
      %s198 = sphi 0, %s184
      %s202 = sphi 0, %s202
      %s204 = sphi 0, %s202
      %s205 = sphi 0, %s204
      %s219 = sphi 0, %s205
      %s223 = sphi 0, %s223
      %s225 = sphi 0, %s223
      %s226 = sphi 0, %s225
      %s240 = sphi 0, %s226
      %s244 = sphi 0, %s244
      %s246 = sphi 0, %s244
      %s247 = sphi 0, %s246
      %s261 = sphi 0, %s247
      %s267 = sphi 0, %s269
      %s270 = sphi 0, %s267
      %s271 = sphi 0, %s270
      %s287 = sphi 0, %s271
    $region4: #{tpu_custom_call.1} parent=1 // loop_header_branch
      %24 = sbr.rel (%p22) target = $region8
    $region5: #{tpu_custom_call.1} parent=1 // loop_body
      %s26 = ssub.s32 %s21, 1
      %s27 = ssub.s32 %s21, 2
      %s28 = sadd.s32 %s21, 1
      %s29 = ssub.s32 %s21, %s28
      %p30 = scmp.eq.s32.totalorder %s29, 0
      %s32 = sadd.s32 %s31, 1
      %s33 = scalar_select %p30, %s31, %s32
      %p36 = pneg %p30
      %p37 = scmp.eq.s32.totalorder %s21, 1
      %p38 = por %p36, %p37
      %p39 = scmp.ne.s32.totalorder %s31, %s34
      %p40 = scmp.eq.s32.totalorder %s21, 0
      %p41 = por %p39, %p40
      %p42 = scmp.ne.s32.totalorder %s31, %s34
      %p43 = scmp.eq.s32.totalorder %s26, 1
      %p44 = por %p42, %p43
      %p45 = scmp.ne.s32.totalorder %s34, %s35
      %p46 = scmp.eq.s32.totalorder %s26, 0
      %p47 = por %p45, %p46
      %p48 = scmp.ne.s32.totalorder %s34, %s35
      %p49 = scmp.eq.s32.totalorder %s27, 1
      %p50 = por %p48, %p49
      %p52 = scmp.ne.s32.totalorder %s35, %s51
      %p53 = scmp.eq.s32.totalorder %s27, 0
      %p54 = por %p52, %p53
      %s56 = sadd.s32 %s55, 1
      %p59 = scmp.eq.s32.totalorder %s21, 1
      %p60 = scmp.ne.s32.totalorder %s55, %s57
      %p61 = scmp.eq.s32.totalorder %s21, 0
      %p62 = por %p60, %p61
      %p63 = scmp.ne.s32.totalorder %s55, %s57
      %p64 = scmp.eq.s32.totalorder %s26, 1
      %p65 = por %p63, %p64
      %p66 = scmp.ne.s32.totalorder %s57, %s58
      %p67 = scmp.eq.s32.totalorder %s26, 0
      %p68 = por %p66, %p67
      %p69 = scmp.ne.s32.totalorder %s57, %s58
      %p70 = scmp.eq.s32.totalorder %s27, 1
      %p71 = por %p69, %p70
      %p73 = scmp.ne.s32.totalorder %s58, %s72
      %p74 = scmp.eq.s32.totalorder %s27, 0
      %p75 = por %p73, %p74
      %s77 = sadd.s32 %s76, 1
      %p80 = scmp.eq.s32.totalorder %s21, 1
      %p81 = scmp.ne.s32.totalorder %s76, %s78
      %p82 = scmp.eq.s32.totalorder %s21, 0
      %p83 = por %p81, %p82
      %p84 = scmp.ne.s32.totalorder %s76, %s78
      %p85 = scmp.eq.s32.totalorder %s26, 1
      %p86 = por %p84, %p85
      %p87 = scmp.ne.s32.totalorder %s78, %s79
      %p88 = scmp.eq.s32.totalorder %s26, 0
      %p89 = por %p87, %p88
      %p90 = scmp.ne.s32.totalorder %s78, %s79
      %p91 = scmp.eq.s32.totalorder %s27, 1
      %p92 = por %p90, %p91
      %p94 = scmp.ne.s32.totalorder %s79, %s93
      %p95 = scmp.eq.s32.totalorder %s27, 0
      %p96 = por %p94, %p95
      %s98 = sadd.s32 %s97, 1
      %p101 = scmp.eq.s32.totalorder %s21, 1
      %p102 = scmp.ne.s32.totalorder %s97, %s99
      %p103 = scmp.eq.s32.totalorder %s21, 0
      %p104 = por %p102, %p103
      %p105 = scmp.ne.s32.totalorder %s97, %s99
      %p106 = scmp.eq.s32.totalorder %s26, 1
      %p107 = por %p105, %p106
      %p108 = scmp.ne.s32.totalorder %s99, %s100
      %p109 = scmp.eq.s32.totalorder %s26, 0
      %p110 = por %p108, %p109
      %p111 = scmp.ne.s32.totalorder %s99, %s100
      %p112 = scmp.eq.s32.totalorder %s27, 1
      %p113 = por %p111, %p112
      %p115 = scmp.ne.s32.totalorder %s100, %s114
      %p116 = scmp.eq.s32.totalorder %s27, 0
      %p117 = por %p115, %p116
      %s119 = sadd.s32 %s118, 1
      %p122 = scmp.eq.s32.totalorder %s21, 1
      %p123 = scmp.ne.s32.totalorder %s118, %s120
      %p124 = scmp.eq.s32.totalorder %s21, 0
      %p125 = por %p123, %p124
      %p126 = scmp.ne.s32.totalorder %s118, %s120
      %p127 = scmp.eq.s32.totalorder %s26, 1
      %p128 = por %p126, %p127
      %p129 = scmp.ne.s32.totalorder %s120, %s121
      %p130 = scmp.eq.s32.totalorder %s26, 0
      %p131 = por %p129, %p130
      %p132 = scmp.ne.s32.totalorder %s120, %s121
      %p133 = scmp.eq.s32.totalorder %s27, 1
      %p134 = por %p132, %p133
      %p136 = scmp.ne.s32.totalorder %s121, %s135
      %p137 = scmp.eq.s32.totalorder %s27, 0
      %p138 = por %p136, %p137
      %s140 = sadd.s32 %s139, 1
      %p143 = scmp.eq.s32.totalorder %s21, 1
      %p144 = scmp.ne.s32.totalorder %s139, %s141
      %p145 = scmp.eq.s32.totalorder %s21, 0
      %p146 = por %p144, %p145
      %p147 = scmp.ne.s32.totalorder %s139, %s141
      %p148 = scmp.eq.s32.totalorder %s26, 1
      %p149 = por %p147, %p148
      %p150 = scmp.ne.s32.totalorder %s141, %s142
      %p151 = scmp.eq.s32.totalorder %s26, 0
      %p152 = por %p150, %p151
      %p153 = scmp.ne.s32.totalorder %s141, %s142
      %p154 = scmp.eq.s32.totalorder %s27, 1
      %p155 = por %p153, %p154
      %p157 = scmp.ne.s32.totalorder %s142, %s156
      %p158 = scmp.eq.s32.totalorder %s27, 0
      %p159 = por %p157, %p158
      %s161 = sadd.s32 %s160, 1
      %p164 = scmp.eq.s32.totalorder %s21, 1
      %p165 = scmp.ne.s32.totalorder %s160, %s162
      %p166 = scmp.eq.s32.totalorder %s21, 0
      %p167 = por %p165, %p166
      %p168 = scmp.ne.s32.totalorder %s160, %s162
      %p169 = scmp.eq.s32.totalorder %s26, 1
      %p170 = por %p168, %p169
      %p171 = scmp.ne.s32.totalorder %s162, %s163
      %p172 = scmp.eq.s32.totalorder %s26, 0
      %p173 = por %p171, %p172
      %p174 = scmp.ne.s32.totalorder %s162, %s163
      %p175 = scmp.eq.s32.totalorder %s27, 1
      %p176 = por %p174, %p175
      %p178 = scmp.ne.s32.totalorder %s163, %s177
      %p179 = scmp.eq.s32.totalorder %s27, 0
      %p180 = por %p178, %p179
      %s182 = sadd.s32 %s181, 1
      %p185 = scmp.eq.s32.totalorder %s21, 1
      %p186 = scmp.ne.s32.totalorder %s181, %s183
      %p187 = scmp.eq.s32.totalorder %s21, 0
      %p188 = por %p186, %p187
      %p189 = scmp.ne.s32.totalorder %s181, %s183
      %p190 = scmp.eq.s32.totalorder %s26, 1
      %p191 = por %p189, %p190
      %p192 = scmp.ne.s32.totalorder %s183, %s184
      %p193 = scmp.eq.s32.totalorder %s26, 0
      %p194 = por %p192, %p193
      %p195 = scmp.ne.s32.totalorder %s183, %s184
      %p196 = scmp.eq.s32.totalorder %s27, 1
      %p197 = por %p195, %p196
      %p199 = scmp.ne.s32.totalorder %s184, %s198
      %p200 = scmp.eq.s32.totalorder %s27, 0
      %p201 = por %p199, %p200
      %s203 = sadd.s32 %s202, 1
      %p206 = scmp.eq.s32.totalorder %s21, 1
      %p207 = scmp.ne.s32.totalorder %s202, %s204
      %p208 = scmp.eq.s32.totalorder %s21, 0
      %p209 = por %p207, %p208
      %p210 = scmp.ne.s32.totalorder %s202, %s204
      %p211 = scmp.eq.s32.totalorder %s26, 1
      %p212 = por %p210, %p211
      %p213 = scmp.ne.s32.totalorder %s204, %s205
      %p214 = scmp.eq.s32.totalorder %s26, 0
      %p215 = por %p213, %p214
      %p216 = scmp.ne.s32.totalorder %s204, %s205
      %p217 = scmp.eq.s32.totalorder %s27, 1
      %p218 = por %p216, %p217
      %p220 = scmp.ne.s32.totalorder %s205, %s219
      %p221 = scmp.eq.s32.totalorder %s27, 0
      %p222 = por %p220, %p221
      %s224 = sadd.s32 %s223, 1
      %p227 = scmp.eq.s32.totalorder %s21, 1
      %p228 = scmp.ne.s32.totalorder %s223, %s225
      %p229 = scmp.eq.s32.totalorder %s21, 0
      %p230 = por %p228, %p229
      %p231 = scmp.ne.s32.totalorder %s223, %s225
      %p232 = scmp.eq.s32.totalorder %s26, 1
      %p233 = por %p231, %p232
      %p234 = scmp.ne.s32.totalorder %s225, %s226
      %p235 = scmp.eq.s32.totalorder %s26, 0
      %p236 = por %p234, %p235
      %p237 = scmp.ne.s32.totalorder %s225, %s226
      %p238 = scmp.eq.s32.totalorder %s27, 1
      %p239 = por %p237, %p238
      %p241 = scmp.ne.s32.totalorder %s226, %s240
      %p242 = scmp.eq.s32.totalorder %s27, 0
      %p243 = por %p241, %p242
      %s245 = sadd.s32 %s244, 1
      %p248 = scmp.eq.s32.totalorder %s21, 1
      %p249 = scmp.ne.s32.totalorder %s244, %s246
      %p250 = scmp.eq.s32.totalorder %s21, 0
      %p251 = por %p249, %p250
      %p252 = scmp.ne.s32.totalorder %s244, %s246
      %p253 = scmp.eq.s32.totalorder %s26, 1
      %p254 = por %p252, %p253
      %p255 = scmp.ne.s32.totalorder %s246, %s247
      %p256 = scmp.eq.s32.totalorder %s26, 0
      %p257 = por %p255, %p256
      %p258 = scmp.ne.s32.totalorder %s246, %s247
      %p259 = scmp.eq.s32.totalorder %s27, 1
      %p260 = por %p258, %p259
      %p262 = scmp.ne.s32.totalorder %s247, %s261
      %p263 = scmp.eq.s32.totalorder %s27, 0
      %p264 = por %p262, %p263
      %s265 = ssub.s32 %s21, %s28
      %p266 = scmp.eq.s32.totalorder %s265, 0
      %s268 = sadd.s32 %s267, 1
      %s269 = scalar_select %p266, %s267, %s268
      %p272 = pneg %p266
      %p273 = scmp.eq.s32.totalorder %s21, 1
      %p274 = por %p272, %p273
      %p275 = scmp.ne.s32.totalorder %s267, %s270
      %p276 = scmp.eq.s32.totalorder %s21, 0
      %p277 = por %p275, %p276
      %p278 = scmp.ne.s32.totalorder %s267, %s270
      %p279 = scmp.eq.s32.totalorder %s26, 1
      %p280 = por %p278, %p279
      %p281 = scmp.ne.s32.totalorder %s270, %s271
      %p282 = scmp.eq.s32.totalorder %s26, 0
      %p283 = por %p281, %p282
      %p284 = scmp.ne.s32.totalorder %s270, %s271
      %p285 = scmp.eq.s32.totalorder %s27, 1
      %p286 = por %p284, %p285
      %p288 = scmp.ne.s32.totalorder %s271, %s287
      %p289 = scmp.eq.s32.totalorder %s27, 0
      %p290 = por %p288, %p289
      %p291 = scmp.le.s32.totalorder 1, %s21
      %p292 = scmp.lt.s32.totalorder %s21, 3
      %p293 = pnand %p291, %p292
      %p294 = pneg %p293
      // Predicated region
      $region9: #{tpu_custom_call.1} parent=5 // pred_check
        _
      $region10: #{tpu_custom_call.1} parent=5 // pred_check_branch
        %296 = sbr.rel (%p293) target = $region12
      $region11: #{tpu_custom_call.1} parent=5 // pred_region
        %s297 = ssub.s32 %s21, 1
        // Predicated region
        $region13: #{tpu_custom_call.1} parent=11 // pred_check
          %p298 = pneg %p68
        $region14: #{tpu_custom_call.1} parent=11 // pred_check_branch
          %300 = sbr.rel (%p298) target = $region16
        $region15: #{tpu_custom_call.1} parent=11 // pred_region
          _
        $region16: #{tpu_custom_call.1} parent=11 // pred_fallthru
          _
        // Predicated region
        $region17: #{tpu_custom_call.1} parent=11 // pred_check
          %p301 = pneg %p89
        $region18: #{tpu_custom_call.1} parent=11 // pred_check_branch
          %303 = sbr.rel (%p301) target = $region20
        $region19: #{tpu_custom_call.1} parent=11 // pred_region
          _
        $region20: #{tpu_custom_call.1} parent=11 // pred_fallthru
          _
        // Predicated region
        $region21: #{tpu_custom_call.1} parent=11 // pred_check
          %p304 = pneg %p110
        $region22: #{tpu_custom_call.1} parent=11 // pred_check_branch
          %306 = sbr.rel (%p304) target = $region24
        $region23: #{tpu_custom_call.1} parent=11 // pred_region
          _
        $region24: #{tpu_custom_call.1} parent=11 // pred_fallthru
          _
        // Predicated region
        $region25: #{tpu_custom_call.1} parent=11 // pred_check
          %p307 = pneg %p131
        $region26: #{tpu_custom_call.1} parent=11 // pred_check_branch
          %309 = sbr.rel (%p307) target = $region28
        $region27: #{tpu_custom_call.1} parent=11 // pred_region
          _
        $region28: #{tpu_custom_call.1} parent=11 // pred_fallthru
          _
        // Predicated region
        $region29: #{tpu_custom_call.1} parent=11 // pred_check
          %p310 = pneg %p152
        $region30: #{tpu_custom_call.1} parent=11 // pred_check_branch
          %312 = sbr.rel (%p310) target = $region32
        $region31: #{tpu_custom_call.1} parent=11 // pred_region
          %314 = vsyncadd [#allocation3], 0
          %s315 = sshll.u32 %s5, 4
          %s316 = int_to_ptr.hbm [resolvable:$true] %s315
          %s317 = sshll.u32 [#allocation2], 4
          %s318 = int_to_ptr.vmem [resolvable:$true] %s317
          %323 = dma.hbm_to_vmem [thread:$0]  %s316, 1024, %s318, [#allocation3], 256, 256, 16
        $region32: #{tpu_custom_call.1} parent=11 // pred_fallthru
          _
        // Predicated region
        $region33: #{tpu_custom_call.1} parent=11 // pred_check
          %p324 = pneg %p173
        $region34: #{tpu_custom_call.1} parent=11 // pred_check_branch
          %326 = sbr.rel (%p324) target = $region36
        $region35: #{tpu_custom_call.1} parent=11 // pred_region
          _
        $region36: #{tpu_custom_call.1} parent=11 // pred_fallthru
          _
        // Predicated region
        $region37: #{tpu_custom_call.1} parent=11 // pred_check
          %p327 = pneg %p194
        $region38: #{tpu_custom_call.1} parent=11 // pred_check_branch
          %329 = sbr.rel (%p327) target = $region40
        $region39: #{tpu_custom_call.1} parent=11 // pred_region
          _
        $region40: #{tpu_custom_call.1} parent=11 // pred_fallthru
          _
        // Predicated region
        $region41: #{tpu_custom_call.1} parent=11 // pred_check
          %p330 = pneg %p215
        $region42: #{tpu_custom_call.1} parent=11 // pred_check_branch
          %332 = sbr.rel (%p330) target = $region44
        $region43: #{tpu_custom_call.1} parent=11 // pred_region
          _
        $region44: #{tpu_custom_call.1} parent=11 // pred_fallthru
          _
        // Predicated region
        $region45: #{tpu_custom_call.1} parent=11 // pred_check
          %p333 = pneg %p236
        $region46: #{tpu_custom_call.1} parent=11 // pred_check_branch
          %335 = sbr.rel (%p333) target = $region48
        $region47: #{tpu_custom_call.1} parent=11 // pred_region
          _
        $region48: #{tpu_custom_call.1} parent=11 // pred_fallthru
          _
        // Predicated region
        $region49: #{tpu_custom_call.1} parent=11 // pred_check
          %p336 = pneg %p257
        $region50: #{tpu_custom_call.1} parent=11 // pred_check_branch
          %338 = sbr.rel (%p336) target = $region52
        $region51: #{tpu_custom_call.1} parent=11 // pred_region
          _
        $region52: #{tpu_custom_call.1} parent=11 // pred_fallthru
          _
      $region12: #{tpu_custom_call.1} parent=5 // pred_fallthru
        _
      %p339 = scmp.lt.s32.totalorder %s21, 2
      // Predicated region
      $region53: #{tpu_custom_call.1} parent=5 // pred_check
        %p340 = pneg %p339
      $region54: #{tpu_custom_call.1} parent=5 // pred_check_branch
        %342 = sbr.rel (%p340) target = $region56
      $region55: #{tpu_custom_call.1} parent=5 // pred_region
        // Predicated region
        $region57: #{tpu_custom_call.1} parent=55 // pred_check
          %p343 = pneg %p41
        $region58: #{tpu_custom_call.1} parent=55 // pred_check_branch
          %345 = sbr.rel (%p343) target = $region60
        $region59: #{tpu_custom_call.1} parent=55 // pred_region
          %p346 = scmp.lt.s32.totalorder %s21, 1
          %s347 = scalar_select %p346, %s21, 1
          %s348 = smul.addr %s347, 2
          %s349 = smul.addr %s348, 4
          %s350 = scalar_lea.vmem %s0, %s349
        $region60: #{tpu_custom_call.1} parent=55 // pred_fallthru
          _
      $region56: #{tpu_custom_call.1} parent=5 // pred_fallthru
        _
      %p351 = scmp.le.s32.totalorder 1, %s21
      %p352 = scmp.lt.s32.totalorder %s21, 3
      %p353 = pnand %p351, %p352
      %p354 = pneg %p353
      // Predicated region
      $region61: #{tpu_custom_call.1} parent=5 // pred_check
        _
      $region62: #{tpu_custom_call.1} parent=5 // pred_check_branch
        %356 = sbr.rel (%p353) target = $region64
      $region63: #{tpu_custom_call.1} parent=5 // pred_region
        %s357 = ssub.s32 %s21, 1
        // Predicated region
        $region65: #{tpu_custom_call.1} parent=63 // pred_check
          %p358 = pneg %p152
        $region66: #{tpu_custom_call.1} parent=63 // pred_check_branch
          %360 = sbr.rel (%p358) target = $region68
        $region67: #{tpu_custom_call.1} parent=63 // pred_region
          %362 = dma.done [#allocation3], 1024
        $region68: #{tpu_custom_call.1} parent=63 // pred_fallthru
          _
        %p363 = scmp.lt.s32.totalorder %s26, 1
        %s364 = scalar_select %p363, %s26, 1
        %s365 = smul.addr %s364, 2
        %s366 = smul.addr %s365, 4
        %s367 = scalar_lea.vmem %s0, %s366
        %p368 = pneg %p47
        %p369 = pneg %p44
        %p370 = pneg %p68
        %p371 = pneg %p65
        %p372 = pneg %p89
        %p373 = pneg %p86
        %p374 = pneg %p110
        %p375 = pneg %p107
        %p376 = pneg %p131
        %p377 = pneg %p128
        %p378 = pneg %p152
        %p379 = pneg %p149
        %p380 = pneg %p173
        %p381 = pneg %p170
        %p382 = pneg %p194
        %p383 = pneg %p191
        %p384 = pneg %p215
        %p385 = pneg %p212
        %p386 = pneg %p236
        %p387 = pneg %p233
        %p388 = pneg %p257
        %p389 = pneg %p254
        %p390 = pneg %p283
        %p391 = pneg %p280
        %s392 = sand.u32 %s270, 1
        %s393 = scalar_lea.sflag [#allocation4], %s392
        %s394 = sand.u32 %s270, 1
        %s395 = smul.addr %s394, 16
        %s396 = scalar_lea.vmem [#allocation5], %s395
        %p397 = scmp.lt.s32.totalorder %s26, 1
        %s398 = scalar_select %p397, %s26, 1
        %s399 = smul.addr %s398, 2
        %s400 = smul.addr %s399, 4
        %s401 = scalar_lea.vmem %s0, %s400
        %v403 = vld [vmem:[%s401] sm:$0xff]
        %v404 = vld [vmem:[%s1] sm:$0xf]
        %v405 = vld [vmem:[%s1 + $0x4] sm:$0xf]
        %v408 = vunpack.c.l.b16 %v404
        %v409 = vunpack.c.l.b16 %v405
        %v410 = vpack.c.b16 %v409, %v408
        %v412 = vunpack.c.l.b16 %v403
        %v413 = vunpack.c.h.b16 %v403
        %v414 = vpack.c.b16 %v412, %v412
        %v415 = vpack.c.b16 %v413, %v413
        %vm416 = vcmask 64512
        %v418 = vsel %vm416, %v410, 0
        %vm420 = vcmask 1043456
        %v422 = vsel %vm420, %v414, 0
        %v425 = vsel %vm420, %v415, 0
        %427 = vmatpush.bf16.msra.mxu0 0
        %428 = vmatpush.bf16.msra.mxu0 0
        %429 = vmatpush.bf16.msra.mxu0 0
        %430 = vmatpush.bf16.msra.mxu0 0
        %431 = vmatpush.bf16.msra.mxu0 0
        %432 = vmatpush.bf16.msra.mxu0 0
        %433 = vmatpush.bf16.msra.mxu0 0
        %434 = vmatpush.bf16.msra.mxu0 %v422
        %435 = vmatmul.bf16.gmra.mxu0 %v418
        %v436 = vpop.f32.mrf.mxu0
        %v437 = vadd.f32 0.0, %v436
        %v438 = vpop.f32.mrf.mxu0
        %v439 = vadd.f32 0.0, %v438
        %440 = vdwg.mxu0
        %441 = vmatpush.bf16.msra.mxu0 0
        %442 = vmatpush.bf16.msra.mxu0 0
        %443 = vmatpush.bf16.msra.mxu0 0
        %444 = vmatpush.bf16.msra.mxu0 0
        %445 = vmatpush.bf16.msra.mxu0 0
        %446 = vmatpush.bf16.msra.mxu0 0
        %447 = vmatpush.bf16.msra.mxu0 0
        %448 = vmatpush.bf16.msra.mxu0 %v425
        %449 = vmatmul.bf16.gmra.mxu0 %v418
        %v450 = vpop.f32.mrf.mxu0
        %v451 = vadd.f32 0.0, %v450
        %v452 = vpop.f32.mrf.mxu0
        %v453 = vadd.f32 0.0, %v452
        %454 = vdwg.mxu0
        %v455 = vld [vmem:[%s2] sm:$0xff]
        %v456 = vld [vmem:[%s2 + $0x8] sm:$0xff]
        %458 = vset.pattern.permute.xlu0 0
        %459 = vperm.xlu0 %458, %v455
        %v460 = vpop.permute.xlu0 %459
        %463 = vset.pattern.permute.xlu0 0
        %464 = vperm.xlu0 %463, %v456
        %v465 = vpop.permute.xlu0 %464
        %v467 = vmul.f32 %v437, %v460
        %v468 = vmul.f32 %v451, %v460
        %v469 = vmul.f32 %v439, %v465
        %v470 = vmul.f32 %v453, %v465
        %v471 = vld [vmem:[%s3] sm:$0xff]
        %v472 = vld [vmem:[%s3 + $0x8] sm:$0xff]
        %474 = vset.pattern.permute.xlu0 0
        %475 = vperm.xlu0 %474, %v471
        %v476 = vpop.permute.xlu0 %475
        %479 = vset.pattern.permute.xlu0 0
        %480 = vperm.xlu0 %479, %v472
        %v481 = vpop.permute.xlu0 %480
        %v483 = vadd.f32 %v467, %v476
        %v484 = vadd.f32 %v468, %v476
        %v485 = vadd.f32 %v469, %v481
        %v486 = vadd.f32 %v470, %v481
        %v487 = vmax.f32 %v483, 0.0
        %v488 = vmax.f32 %v484, 0.0
        %v489 = vmax.f32 %v485, 0.0
        %v490 = vmax.f32 %v486, 0.0
        %v491 = vmin.f32 %v487, 6.0
        %v492 = vmin.f32 %v488, 6.0
        %v493 = vmin.f32 %v489, 6.0
        %v494 = vmin.f32 %v490, 6.0
        %497 = vrot.lane.b32.xlu0 %v492, 73
        %v498 = vpop.permute.xlu0 %497
        %499 = vrot.lane.b32.xlu0 %v494, 73
        %v500 = vpop.permute.xlu0 %499
        %505 = vrot.lane.b32.xlu0 %v491, 73
        %v506 = vpop.permute.xlu0 %505
        %507 = vrot.lane.b32.xlu0 %v493, 73
        %v508 = vpop.permute.xlu0 %507
        %vm509 = vcmask 596992
        %v510 = vsel %vm509, %v506, %v498
        %v511 = vsel %vm509, %v508, %v500
        %v516 = vsel %vm509, %v498, %v506
        %v517 = vsel %vm509, %v500, %v508
        %v518 = vld [vmem:[%s4] sm:$0xff]
        %v519 = vld [vmem:[%s4 + $0x8] sm:$0xff]
        %521 = vset.pattern.permute.xlu0 0
        %522 = vperm.xlu0 %521, %v518
        %v523 = vpop.permute.xlu0 %522
        %526 = vset.pattern.permute.xlu0 0
        %527 = vperm.xlu0 %526, %v519
        %v528 = vpop.permute.xlu0 %527
        %v530 = vmul.f32 %v516, %v523
        %v531 = vmul.f32 %v510, %v523
        %v532 = vmul.f32 %v517, %v528
        %v533 = vmul.f32 %v511, %v528
        %v534 = vld [vmem:[#allocation2] ss:$8 sm:$0x3]
        %v536 = vperm.slane %v534, 0
        %v537 = vperm.slane %v534, 1
        %v540 = vmul.f32 %v530, %v536
        %v541 = vmul.f32 %v531, %v537
        %v542 = vmul.f32 %v532, %v536
        %v543 = vmul.f32 %v533, %v537
        %v544 = vadd.f32 %v540, 0.0
        %v545 = vadd.f32 %v541, 0.0
        %v546 = vadd.f32 %v542, 0.0
        %v547 = vadd.f32 %v543, 0.0
        %548 = vrot.lane.b32.xlu0 %v492, 72
        %v549 = vpop.permute.xlu0 %548
        %550 = vrot.lane.b32.xlu0 %v494, 72
        %v551 = vpop.permute.xlu0 %550
        %554 = vrot.lane.b32.xlu0 %v491, 72
        %v555 = vpop.permute.xlu0 %554
        %556 = vrot.lane.b32.xlu0 %v493, 72
        %v557 = vpop.permute.xlu0 %556
        %vm558 = vcmask 588800
        %v559 = vsel %vm558, %v555, %v549
        %v560 = vsel %vm558, %v557, %v551
        %v565 = vsel %vm558, %v549, %v555
        %v566 = vsel %vm558, %v551, %v557
        %567 = vset.pattern.permute.xlu0 1
        %568 = vperm.xlu0 %567, %v518
        %v569 = vpop.permute.xlu0 %568
        %571 = vset.pattern.permute.xlu0 1
        %572 = vperm.xlu0 %571, %v519
        %v573 = vpop.permute.xlu0 %572
        %v575 = vmul.f32 %v565, %v569
        %v576 = vmul.f32 %v559, %v569
        %v577 = vmul.f32 %v566, %v573
        %v578 = vmul.f32 %v560, %v573
        %s579 = scalar_lea.vmem [#allocation2], 1
        %v580 = vld [vmem:[%s579] ss:$8 sm:$0x3]
        %v582 = vperm.slane %v580, 0
        %v583 = vperm.slane %v580, 1
        %v586 = vmul.f32 %v575, %v582
        %v587 = vmul.f32 %v576, %v583
        %v588 = vmul.f32 %v577, %v582
        %v589 = vmul.f32 %v578, %v583
        %v590 = vadd.f32 %v544, %v586
        %v591 = vadd.f32 %v545, %v587
        %v592 = vadd.f32 %v546, %v588
        %v593 = vadd.f32 %v547, %v589
        %594 = vrot.lane.b32.xlu0 %v492, 71
        %v595 = vpop.permute.xlu0 %594
        %596 = vrot.lane.b32.xlu0 %v494, 71
        %v597 = vpop.permute.xlu0 %596
        %600 = vrot.lane.b32.xlu0 %v491, 71
        %v601 = vpop.permute.xlu0 %600
        %602 = vrot.lane.b32.xlu0 %v493, 71
        %v603 = vpop.permute.xlu0 %602
        %vm604 = vcmask 580608
        %v605 = vsel %vm604, %v601, %v595
        %v606 = vsel %vm604, %v603, %v597
        %v611 = vsel %vm604, %v595, %v601
        %v612 = vsel %vm604, %v597, %v603
        %613 = vset.pattern.permute.xlu0 2
        %614 = vperm.xlu0 %613, %v518
        %v615 = vpop.permute.xlu0 %614
        %617 = vset.pattern.permute.xlu0 2
        %618 = vperm.xlu0 %617, %v519
        %v619 = vpop.permute.xlu0 %618
        %v621 = vmul.f32 %v611, %v615
        %v622 = vmul.f32 %v605, %v615
        %v623 = vmul.f32 %v612, %v619
        %v624 = vmul.f32 %v606, %v619
        %s625 = scalar_lea.vmem [#allocation2], 2
        %v626 = vld [vmem:[%s625] ss:$8 sm:$0x3]
        %v628 = vperm.slane %v626, 0
        %v629 = vperm.slane %v626, 1
        %v632 = vmul.f32 %v621, %v628
        %v633 = vmul.f32 %v622, %v629
        %v634 = vmul.f32 %v623, %v628
        %v635 = vmul.f32 %v624, %v629
        %v636 = vadd.f32 %v590, %v632
        %v637 = vadd.f32 %v591, %v633
        %v638 = vadd.f32 %v592, %v634
        %v639 = vadd.f32 %v593, %v635
        %640 = vrot.lane.b32.xlu0 %v492, 65
        %v641 = vpop.permute.xlu0 %640
        %642 = vrot.lane.b32.xlu0 %v494, 65
        %v643 = vpop.permute.xlu0 %642
        %646 = vrot.lane.b32.xlu0 %v491, 65
        %v647 = vpop.permute.xlu0 %646
        %648 = vrot.lane.b32.xlu0 %v493, 65
        %v649 = vpop.permute.xlu0 %648
        %vm650 = vcmask 531456
        %v651 = vsel %vm650, %v647, %v641
        %v652 = vsel %vm650, %v649, %v643
        %v657 = vsel %vm650, %v641, %v647
        %v658 = vsel %vm650, %v643, %v649
        %659 = vset.pattern.permute.xlu0 3
        %660 = vperm.xlu0 %659, %v518
        %v661 = vpop.permute.xlu0 %660
        %663 = vset.pattern.permute.xlu0 3
        %664 = vperm.xlu0 %663, %v519
        %v665 = vpop.permute.xlu0 %664
        %v667 = vmul.f32 %v657, %v661
        %v668 = vmul.f32 %v651, %v661
        %v669 = vmul.f32 %v658, %v665
        %v670 = vmul.f32 %v652, %v665
        %s671 = scalar_lea.vmem [#allocation2], 3
        %v672 = vld [vmem:[%s671] ss:$8 sm:$0x3]
        %v674 = vperm.slane %v672, 0
        %v675 = vperm.slane %v672, 1
        %v678 = vmul.f32 %v667, %v674
        %v679 = vmul.f32 %v668, %v675
        %v680 = vmul.f32 %v669, %v674
        %v681 = vmul.f32 %v670, %v675
        %v682 = vadd.f32 %v636, %v678
        %v683 = vadd.f32 %v637, %v679
        %v684 = vadd.f32 %v638, %v680
        %v685 = vadd.f32 %v639, %v681
        %686 = vrot.lane.b32.xlu0 %v492, 64
        %v687 = vpop.permute.xlu0 %686
        %688 = vrot.lane.b32.xlu0 %v494, 64
        %v689 = vpop.permute.xlu0 %688
        %692 = vrot.lane.b32.xlu0 %v491, 64
        %v693 = vpop.permute.xlu0 %692
        %694 = vrot.lane.b32.xlu0 %v493, 64
        %v695 = vpop.permute.xlu0 %694
        %vm696 = vcmask 523264
        %v697 = vsel %vm696, %v693, %v687
        %v698 = vsel %vm696, %v695, %v689
        %v703 = vsel %vm696, %v687, %v693
        %v704 = vsel %vm696, %v689, %v695
        %705 = vset.pattern.permute.xlu0 4
        %706 = vperm.xlu0 %705, %v518
        %v707 = vpop.permute.xlu0 %706
        %709 = vset.pattern.permute.xlu0 4
        %710 = vperm.xlu0 %709, %v519
        %v711 = vpop.permute.xlu0 %710
        %v713 = vmul.f32 %v703, %v707
        %v714 = vmul.f32 %v697, %v707
        %v715 = vmul.f32 %v704, %v711
        %v716 = vmul.f32 %v698, %v711
        %s717 = scalar_lea.vmem [#allocation2], 4
        %v718 = vld [vmem:[%s717] ss:$8 sm:$0x3]
        %v720 = vperm.slane %v718, 0
        %v721 = vperm.slane %v718, 1
        %v724 = vmul.f32 %v713, %v720
        %v725 = vmul.f32 %v714, %v721
        %v726 = vmul.f32 %v715, %v720
        %v727 = vmul.f32 %v716, %v721
        %v728 = vadd.f32 %v682, %v724
        %v729 = vadd.f32 %v683, %v725
        %v730 = vadd.f32 %v684, %v726
        %v731 = vadd.f32 %v685, %v727
        %732 = vrot.lane.b32.xlu0 %v492, 63
        %v733 = vpop.permute.xlu0 %732
        %734 = vrot.lane.b32.xlu0 %v494, 63
        %v735 = vpop.permute.xlu0 %734
        %738 = vrot.lane.b32.xlu0 %v491, 63
        %v739 = vpop.permute.xlu0 %738
        %740 = vrot.lane.b32.xlu0 %v493, 63
        %v741 = vpop.permute.xlu0 %740
        %vm742 = vcmask 515072
        %v743 = vsel %vm742, %v739, %v733
        %v744 = vsel %vm742, %v741, %v735
        %v749 = vsel %vm742, %v733, %v739
        %v750 = vsel %vm742, %v735, %v741
        %751 = vset.pattern.permute.xlu0 5
        %752 = vperm.xlu0 %751, %v518
        %v753 = vpop.permute.xlu0 %752
        %755 = vset.pattern.permute.xlu0 5
        %756 = vperm.xlu0 %755, %v519
        %v757 = vpop.permute.xlu0 %756
        %v759 = vmul.f32 %v749, %v753
        %v760 = vmul.f32 %v743, %v753
        %v761 = vmul.f32 %v750, %v757
        %v762 = vmul.f32 %v744, %v757
        %s763 = scalar_lea.vmem [#allocation2], 5
        %v764 = vld [vmem:[%s763] ss:$8 sm:$0x3]
        %v766 = vperm.slane %v764, 0
        %v767 = vperm.slane %v764, 1
        %v770 = vmul.f32 %v759, %v766
        %v771 = vmul.f32 %v760, %v767
        %v772 = vmul.f32 %v761, %v766
        %v773 = vmul.f32 %v762, %v767
        %v774 = vadd.f32 %v728, %v770
        %v775 = vadd.f32 %v729, %v771
        %v776 = vadd.f32 %v730, %v772
        %v777 = vadd.f32 %v731, %v773
        %778 = vrot.lane.b32.xlu0 %v492, 57
        %v779 = vpop.permute.xlu0 %778
        %780 = vrot.lane.b32.xlu0 %v494, 57
        %v781 = vpop.permute.xlu0 %780
        %784 = vrot.lane.b32.xlu0 %v491, 57
        %v785 = vpop.permute.xlu0 %784
        %786 = vrot.lane.b32.xlu0 %v493, 57
        %v787 = vpop.permute.xlu0 %786
        %vm788 = vcmask 465920
        %v789 = vsel %vm788, %v785, %v779
        %v790 = vsel %vm788, %v787, %v781
        %v795 = vsel %vm788, %v779, %v785
        %v796 = vsel %vm788, %v781, %v787
        %797 = vset.pattern.permute.xlu0 6
        %798 = vperm.xlu0 %797, %v518
        %v799 = vpop.permute.xlu0 %798
        %801 = vset.pattern.permute.xlu0 6
        %802 = vperm.xlu0 %801, %v519
        %v803 = vpop.permute.xlu0 %802
        %v805 = vmul.f32 %v795, %v799
        %v806 = vmul.f32 %v789, %v799
        %v807 = vmul.f32 %v796, %v803
        %v808 = vmul.f32 %v790, %v803
        %s809 = scalar_lea.vmem [#allocation2], 6
        %v810 = vld [vmem:[%s809] ss:$8 sm:$0x3]
        %v812 = vperm.slane %v810, 0
        %v813 = vperm.slane %v810, 1
        %v816 = vmul.f32 %v805, %v812
        %v817 = vmul.f32 %v806, %v813
        %v818 = vmul.f32 %v807, %v812
        %v819 = vmul.f32 %v808, %v813
        %v820 = vadd.f32 %v774, %v816
        %v821 = vadd.f32 %v775, %v817
        %v822 = vadd.f32 %v776, %v818
        %v823 = vadd.f32 %v777, %v819
        %824 = vrot.lane.b32.xlu0 %v492, 56
        %v825 = vpop.permute.xlu0 %824
        %826 = vrot.lane.b32.xlu0 %v494, 56
        %v827 = vpop.permute.xlu0 %826
        %830 = vrot.lane.b32.xlu0 %v491, 56
        %v831 = vpop.permute.xlu0 %830
        %832 = vrot.lane.b32.xlu0 %v493, 56
        %v833 = vpop.permute.xlu0 %832
        %vm834 = vcmask 457728
        %v835 = vsel %vm834, %v831, %v825
        %v836 = vsel %vm834, %v833, %v827
        %v841 = vsel %vm834, %v825, %v831
        %v842 = vsel %vm834, %v827, %v833
        %843 = vset.pattern.permute.xlu0 7
        %844 = vperm.xlu0 %843, %v518
        %v845 = vpop.permute.xlu0 %844
        %847 = vset.pattern.permute.xlu0 7
        %848 = vperm.xlu0 %847, %v519
        %v849 = vpop.permute.xlu0 %848
        %v851 = vmul.f32 %v841, %v845
        %v852 = vmul.f32 %v835, %v845
        %v853 = vmul.f32 %v842, %v849
        %v854 = vmul.f32 %v836, %v849
        %s855 = scalar_lea.vmem [#allocation2], 7
        %v856 = vld [vmem:[%s855] ss:$8 sm:$0x3]
        %v858 = vperm.slane %v856, 0
        %v859 = vperm.slane %v856, 1
        %v862 = vmul.f32 %v851, %v858
        %v863 = vmul.f32 %v852, %v859
        %v864 = vmul.f32 %v853, %v858
        %v865 = vmul.f32 %v854, %v859
        %v866 = vadd.f32 %v820, %v862
        %v867 = vadd.f32 %v821, %v863
        %v868 = vadd.f32 %v822, %v864
        %v869 = vadd.f32 %v823, %v865
        %870 = vrot.lane.b32.xlu0 %v492, 55
        %v871 = vpop.permute.xlu0 %870
        %872 = vrot.lane.b32.xlu0 %v494, 55
        %v873 = vpop.permute.xlu0 %872
        %876 = vrot.lane.b32.xlu0 %v491, 55
        %v877 = vpop.permute.xlu0 %876
        %878 = vrot.lane.b32.xlu0 %v493, 55
        %v879 = vpop.permute.xlu0 %878
        %vm880 = vcmask 449536
        %v881 = vsel %vm880, %v877, %v871
        %v882 = vsel %vm880, %v879, %v873
        %v887 = vsel %vm880, %v871, %v877
        %v888 = vsel %vm880, %v873, %v879
        %889 = vset.pattern.permute.xlu0 8
        %890 = vperm.xlu0 %889, %v518
        %v891 = vpop.permute.xlu0 %890
        %893 = vset.pattern.permute.xlu0 8
        %894 = vperm.xlu0 %893, %v519
        %v895 = vpop.permute.xlu0 %894
        %v897 = vmul.f32 %v887, %v891
        %v898 = vmul.f32 %v881, %v891
        %v899 = vmul.f32 %v888, %v895
        %v900 = vmul.f32 %v882, %v895
        %s901 = scalar_lea.vmem [#allocation2], 16
        %v902 = vld [vmem:[%s901] ss:$8 sm:$0x3]
        %v904 = vperm.slane %v902, 0
        %v905 = vperm.slane %v902, 1
        %v908 = vmul.f32 %v897, %v904
        %v909 = vmul.f32 %v898, %v905
        %v910 = vmul.f32 %v899, %v904
        %v911 = vmul.f32 %v900, %v905
        %v912 = vadd.f32 %v866, %v908
        %v913 = vadd.f32 %v867, %v909
        %v914 = vadd.f32 %v868, %v910
        %v915 = vadd.f32 %v869, %v911
        %916 = vrot.lane.b32.xlu0 %v492, 9
        %v917 = vpop.permute.xlu0 %916
        %918 = vrot.lane.b32.xlu0 %v494, 9
        %v919 = vpop.permute.xlu0 %918
        %922 = vrot.lane.b32.xlu0 %v491, 9
        %v923 = vpop.permute.xlu0 %922
        %924 = vrot.lane.b32.xlu0 %v493, 9
        %v925 = vpop.permute.xlu0 %924
        %vm926 = vcmask 72704
        %v927 = vsel %vm926, %v923, %v917
        %v928 = vsel %vm926, %v925, %v919
        %v933 = vsel %vm926, %v917, %v923
        %v934 = vsel %vm926, %v919, %v925
        %935 = vset.pattern.permute.xlu0 9
        %936 = vperm.xlu0 %935, %v518
        %v937 = vpop.permute.xlu0 %936
        %939 = vset.pattern.permute.xlu0 9
        %940 = vperm.xlu0 %939, %v519
        %v941 = vpop.permute.xlu0 %940
        %v943 = vmul.f32 %v933, %v937
        %v944 = vmul.f32 %v927, %v937
        %v945 = vmul.f32 %v934, %v941
        %v946 = vmul.f32 %v928, %v941
        %s947 = scalar_lea.vmem [#allocation2], 17
        %v948 = vld [vmem:[%s947] ss:$8 sm:$0x3]
        %v950 = vperm.slane %v948, 0
        %v951 = vperm.slane %v948, 1
        %v954 = vmul.f32 %v943, %v950
        %v955 = vmul.f32 %v944, %v951
        %v956 = vmul.f32 %v945, %v950
        %v957 = vmul.f32 %v946, %v951
        %v958 = vadd.f32 %v912, %v954
        %v959 = vadd.f32 %v913, %v955
        %v960 = vadd.f32 %v914, %v956
        %v961 = vadd.f32 %v915, %v957
        %962 = vrot.lane.b32.xlu0 %v492, 8
        %v963 = vpop.permute.xlu0 %962
        %964 = vrot.lane.b32.xlu0 %v494, 8
        %v965 = vpop.permute.xlu0 %964
        %968 = vrot.lane.b32.xlu0 %v491, 8
        %v969 = vpop.permute.xlu0 %968
        %970 = vrot.lane.b32.xlu0 %v493, 8
        %v971 = vpop.permute.xlu0 %970
        %v972 = vsel %vm416, %v969, %v963
        %v973 = vsel %vm416, %v971, %v965
        %v978 = vsel %vm416, %v963, %v969
        %v979 = vsel %vm416, %v965, %v971
        %980 = vset.pattern.permute.xlu0 10
        %981 = vperm.xlu0 %980, %v518
        %v982 = vpop.permute.xlu0 %981
        %984 = vset.pattern.permute.xlu0 10
        %985 = vperm.xlu0 %984, %v519
        %v986 = vpop.permute.xlu0 %985
        %v988 = vmul.f32 %v978, %v982
        %v989 = vmul.f32 %v972, %v982
        %v990 = vmul.f32 %v979, %v986
        %v991 = vmul.f32 %v973, %v986
        %s992 = scalar_lea.vmem [#allocation2], 18
        %v993 = vld [vmem:[%s992] ss:$8 sm:$0x3]
        %v995 = vperm.slane %v993, 0
        %v996 = vperm.slane %v993, 1
        %v999 = vmul.f32 %v988, %v995
        %v1000 = vmul.f32 %v989, %v996
        %v1001 = vmul.f32 %v990, %v995
        %v1002 = vmul.f32 %v991, %v996
        %v1003 = vadd.f32 %v958, %v999
        %v1004 = vadd.f32 %v959, %v1000
        %v1005 = vadd.f32 %v960, %v1001
        %v1006 = vadd.f32 %v961, %v1002
        %1007 = vrot.lane.b32.xlu0 %v492, 7
        %v1008 = vpop.permute.xlu0 %1007
        %1009 = vrot.lane.b32.xlu0 %v494, 7
        %v1010 = vpop.permute.xlu0 %1009
        %1013 = vrot.lane.b32.xlu0 %v491, 7
        %v1014 = vpop.permute.xlu0 %1013
        %1015 = vrot.lane.b32.xlu0 %v493, 7
        %v1016 = vpop.permute.xlu0 %1015
        %vm1017 = vcmask 56320
        %v1018 = vsel %vm1017, %v1014, %v1008
        %v1019 = vsel %vm1017, %v1016, %v1010
        %v1024 = vsel %vm1017, %v1008, %v1014
        %v1025 = vsel %vm1017, %v1010, %v1016
        %1026 = vset.pattern.permute.xlu0 11
        %1027 = vperm.xlu0 %1026, %v518
        %v1028 = vpop.permute.xlu0 %1027
        %1030 = vset.pattern.permute.xlu0 11
        %1031 = vperm.xlu0 %1030, %v519
        %v1032 = vpop.permute.xlu0 %1031
        %v1034 = vmul.f32 %v1024, %v1028
        %v1035 = vmul.f32 %v1018, %v1028
        %v1036 = vmul.f32 %v1025, %v1032
        %v1037 = vmul.f32 %v1019, %v1032
        %s1038 = scalar_lea.vmem [#allocation2], 19
        %v1039 = vld [vmem:[%s1038] ss:$8 sm:$0x3]
        %v1041 = vperm.slane %v1039, 0
        %v1042 = vperm.slane %v1039, 1
        %v1045 = vmul.f32 %v1034, %v1041
        %v1046 = vmul.f32 %v1035, %v1042
        %v1047 = vmul.f32 %v1036, %v1041
        %v1048 = vmul.f32 %v1037, %v1042
        %v1049 = vadd.f32 %v1003, %v1045
        %v1050 = vadd.f32 %v1004, %v1046
        %v1051 = vadd.f32 %v1005, %v1047
        %v1052 = vadd.f32 %v1006, %v1048
        %1053 = vrot.lane.b32.xlu0 %v492, 1
        %v1054 = vpop.permute.xlu0 %1053
        %1055 = vrot.lane.b32.xlu0 %v494, 1
        %v1056 = vpop.permute.xlu0 %1055
        %1059 = vrot.lane.b32.xlu0 %v491, 1
        %v1060 = vpop.permute.xlu0 %1059
        %1061 = vrot.lane.b32.xlu0 %v493, 1
        %v1062 = vpop.permute.xlu0 %1061
        %vm1063 = vcmask 7168
        %v1064 = vsel %vm1063, %v1060, %v1054
        %v1065 = vsel %vm1063, %v1062, %v1056
        %v1070 = vsel %vm1063, %v1054, %v1060
        %v1071 = vsel %vm1063, %v1056, %v1062
        %1072 = vset.pattern.permute.xlu0 12
        %1073 = vperm.xlu0 %1072, %v518
        %v1074 = vpop.permute.xlu0 %1073
        %1076 = vset.pattern.permute.xlu0 12
        %1077 = vperm.xlu0 %1076, %v519
        %v1078 = vpop.permute.xlu0 %1077
        %v1080 = vmul.f32 %v1070, %v1074
        %v1081 = vmul.f32 %v1064, %v1074
        %v1082 = vmul.f32 %v1071, %v1078
        %v1083 = vmul.f32 %v1065, %v1078
        %s1084 = scalar_lea.vmem [#allocation2], 20
        %v1085 = vld [vmem:[%s1084] ss:$8 sm:$0x3]
        %v1087 = vperm.slane %v1085, 0
        %v1088 = vperm.slane %v1085, 1
        %v1091 = vmul.f32 %v1080, %v1087
        %v1092 = vmul.f32 %v1081, %v1088
        %v1093 = vmul.f32 %v1082, %v1087
        %v1094 = vmul.f32 %v1083, %v1088
        %v1095 = vadd.f32 %v1049, %v1091
        %v1096 = vadd.f32 %v1050, %v1092
        %v1097 = vadd.f32 %v1051, %v1093
        %v1098 = vadd.f32 %v1052, %v1094
        %1099 = vset.pattern.permute.xlu0 13
        %1100 = vperm.xlu0 %1099, %v518
        %v1101 = vpop.permute.xlu0 %1100
        %1103 = vset.pattern.permute.xlu0 13
        %1104 = vperm.xlu0 %1103, %v519
        %v1105 = vpop.permute.xlu0 %1104
        %v1107 = vmul.f32 %v491, %v1101
        %v1108 = vmul.f32 %v492, %v1101
        %v1109 = vmul.f32 %v493, %v1105
        %v1110 = vmul.f32 %v494, %v1105
        %v1111 = vadd.f32 %v1095, %v1107
        %v1112 = vadd.f32 %v1096, %v1108
        %v1113 = vadd.f32 %v1097, %v1109
        %v1114 = vadd.f32 %v1098, %v1110
        %1115 = vrot.lane.b32.xlu0 %v491, 127
        %v1116 = vpop.permute.xlu0 %1115
        %1117 = vrot.lane.b32.xlu0 %v492, 127
        %v1118 = vpop.permute.xlu0 %1117
        %1119 = vrot.lane.b32.xlu0 %v493, 127
        %v1120 = vpop.permute.xlu0 %1119
        %1121 = vrot.lane.b32.xlu0 %v494, 127
        %v1122 = vpop.permute.xlu0 %1121
        %vm1123 = vcmask 1039360
        %v1124 = vsel %vm1123, %v1116, %v1118
        %v1125 = vsel %vm1123, %v1120, %v1122
        %v1132 = vsel %vm1123, %v1118, %v1116
        %v1133 = vsel %vm1123, %v1122, %v1120
        %1134 = vset.pattern.permute.xlu0 14
        %1135 = vperm.xlu0 %1134, %v518
        %v1136 = vpop.permute.xlu0 %1135
        %1138 = vset.pattern.permute.xlu0 14
        %1139 = vperm.xlu0 %1138, %v519
        %v1140 = vpop.permute.xlu0 %1139
        %v1142 = vmul.f32 %v1124, %v1136
        %v1143 = vmul.f32 %v1132, %v1136
        %v1144 = vmul.f32 %v1125, %v1140
        %v1145 = vmul.f32 %v1133, %v1140
        %s1146 = scalar_lea.vmem [#allocation2], 22
        %v1147 = vld [vmem:[%s1146] ss:$8 sm:$0x3]
        %v1149 = vperm.slane %v1147, 0
        %v1150 = vperm.slane %v1147, 1
        %v1153 = vmul.f32 %v1142, %v1149
        %v1154 = vmul.f32 %v1143, %v1150
        %v1155 = vmul.f32 %v1144, %v1149
        %v1156 = vmul.f32 %v1145, %v1150
        %v1157 = vadd.f32 %v1111, %v1153
        %v1158 = vadd.f32 %v1112, %v1154
        %v1159 = vadd.f32 %v1113, %v1155
        %v1160 = vadd.f32 %v1114, %v1156
        %1161 = vrot.lane.b32.xlu0 %v491, 121
        %v1162 = vpop.permute.xlu0 %1161
        %1163 = vrot.lane.b32.xlu0 %v492, 121
        %v1164 = vpop.permute.xlu0 %1163
        %1165 = vrot.lane.b32.xlu0 %v493, 121
        %v1166 = vpop.permute.xlu0 %1165
        %1167 = vrot.lane.b32.xlu0 %v494, 121
        %v1168 = vpop.permute.xlu0 %1167
        %vm1169 = vcmask 990208
        %v1170 = vsel %vm1169, %v1162, %v1164
        %v1171 = vsel %vm1169, %v1166, %v1168
        %v1178 = vsel %vm1169, %v1164, %v1162
        %v1179 = vsel %vm1169, %v1168, %v1166
        %1180 = vset.pattern.permute.xlu0 15
        %1181 = vperm.xlu0 %1180, %v518
        %v1182 = vpop.permute.xlu0 %1181
        %1184 = vset.pattern.permute.xlu0 15
        %1185 = vperm.xlu0 %1184, %v519
        %v1186 = vpop.permute.xlu0 %1185
        %v1188 = vmul.f32 %v1170, %v1182
        %v1189 = vmul.f32 %v1178, %v1182
        %v1190 = vmul.f32 %v1171, %v1186
        %v1191 = vmul.f32 %v1179, %v1186
        %s1192 = scalar_lea.vmem [#allocation2], 23
        %v1193 = vld [vmem:[%s1192] ss:$8 sm:$0x3]
        %v1195 = vperm.slane %v1193, 0
        %v1196 = vperm.slane %v1193, 1
        %v1199 = vmul.f32 %v1188, %v1195
        %v1200 = vmul.f32 %v1189, %v1196
        %v1201 = vmul.f32 %v1190, %v1195
        %v1202 = vmul.f32 %v1191, %v1196
        %v1203 = vadd.f32 %v1157, %v1199
        %v1204 = vadd.f32 %v1158, %v1200
        %v1205 = vadd.f32 %v1159, %v1201
        %v1206 = vadd.f32 %v1160, %v1202
        %1207 = vrot.lane.b32.xlu0 %v491, 120
        %v1208 = vpop.permute.xlu0 %1207
        %1209 = vrot.lane.b32.xlu0 %v492, 120
        %v1210 = vpop.permute.xlu0 %1209
        %1211 = vrot.lane.b32.xlu0 %v493, 120
        %v1212 = vpop.permute.xlu0 %1211
        %1213 = vrot.lane.b32.xlu0 %v494, 120
        %v1214 = vpop.permute.xlu0 %1213
        %vm1215 = vcmask 982016
        %v1216 = vsel %vm1215, %v1208, %v1210
        %v1217 = vsel %vm1215, %v1212, %v1214
        %v1224 = vsel %vm1215, %v1210, %v1208
        %v1225 = vsel %vm1215, %v1214, %v1212
        %1226 = vset.pattern.permute.xlu0 16
        %1227 = vperm.xlu0 %1226, %v518
        %v1228 = vpop.permute.xlu0 %1227
        %1230 = vset.pattern.permute.xlu0 16
        %1231 = vperm.xlu0 %1230, %v519
        %v1232 = vpop.permute.xlu0 %1231
        %v1234 = vmul.f32 %v1216, %v1228
        %v1235 = vmul.f32 %v1224, %v1228
        %v1236 = vmul.f32 %v1217, %v1232
        %v1237 = vmul.f32 %v1225, %v1232
        %s1238 = scalar_lea.vmem [#allocation2], 32
        %v1239 = vld [vmem:[%s1238] ss:$8 sm:$0x3]
        %v1241 = vperm.slane %v1239, 0
        %v1242 = vperm.slane %v1239, 1
        %v1245 = vmul.f32 %v1234, %v1241
        %v1246 = vmul.f32 %v1235, %v1242
        %v1247 = vmul.f32 %v1236, %v1241
        %v1248 = vmul.f32 %v1237, %v1242
        %v1249 = vadd.f32 %v1203, %v1245
        %v1250 = vadd.f32 %v1204, %v1246
        %v1251 = vadd.f32 %v1205, %v1247
        %v1252 = vadd.f32 %v1206, %v1248
        %1253 = vrot.lane.b32.xlu0 %v491, 119
        %v1254 = vpop.permute.xlu0 %1253
        %1255 = vrot.lane.b32.xlu0 %v492, 119
        %v1256 = vpop.permute.xlu0 %1255
        %1257 = vrot.lane.b32.xlu0 %v493, 119
        %v1258 = vpop.permute.xlu0 %1257
        %1259 = vrot.lane.b32.xlu0 %v494, 119
        %v1260 = vpop.permute.xlu0 %1259
        %vm1261 = vcmask 973824
        %v1262 = vsel %vm1261, %v1254, %v1256
        %v1263 = vsel %vm1261, %v1258, %v1260
        %v1270 = vsel %vm1261, %v1256, %v1254
        %v1271 = vsel %vm1261, %v1260, %v1258
        %1272 = vset.pattern.permute.xlu0 17
        %1273 = vperm.xlu0 %1272, %v518
        %v1274 = vpop.permute.xlu0 %1273
        %1276 = vset.pattern.permute.xlu0 17
        %1277 = vperm.xlu0 %1276, %v519
        %v1278 = vpop.permute.xlu0 %1277
        %v1280 = vmul.f32 %v1262, %v1274
        %v1281 = vmul.f32 %v1270, %v1274
        %v1282 = vmul.f32 %v1263, %v1278
        %v1283 = vmul.f32 %v1271, %v1278
        %s1284 = scalar_lea.vmem [#allocation2], 33
        %v1285 = vld [vmem:[%s1284] ss:$8 sm:$0x3]
        %v1287 = vperm.slane %v1285, 0
        %v1288 = vperm.slane %v1285, 1
        %v1291 = vmul.f32 %v1280, %v1287
        %v1292 = vmul.f32 %v1281, %v1288
        %v1293 = vmul.f32 %v1282, %v1287
        %v1294 = vmul.f32 %v1283, %v1288
        %v1295 = vadd.f32 %v1249, %v1291
        %v1296 = vadd.f32 %v1250, %v1292
        %v1297 = vadd.f32 %v1251, %v1293
        %v1298 = vadd.f32 %v1252, %v1294
        %1299 = vset.pattern.permute.xlu0 18
        %1300 = vperm.xlu0 %1299, %v518
        %v1301 = vpop.permute.xlu0 %1300
        %1303 = vset.pattern.permute.xlu0 18
        %1304 = vperm.xlu0 %1303, %v519
        %v1305 = vpop.permute.xlu0 %1304
        %v1307 = vmul.f32 %v510, %v1301
        %v1308 = vmul.f32 %v516, %v1301
        %v1309 = vmul.f32 %v511, %v1305
        %v1310 = vmul.f32 %v517, %v1305
        %s1311 = scalar_lea.vmem [#allocation2], 34
        %v1312 = vld [vmem:[%s1311] ss:$8 sm:$0x3]
        %v1314 = vperm.slane %v1312, 0
        %v1315 = vperm.slane %v1312, 1
        %v1318 = vmul.f32 %v1307, %v1314
        %v1319 = vmul.f32 %v1308, %v1315
        %v1320 = vmul.f32 %v1309, %v1314
        %v1321 = vmul.f32 %v1310, %v1315
        %v1322 = vadd.f32 %v1295, %v1318
        %v1323 = vadd.f32 %v1296, %v1319
        %v1324 = vadd.f32 %v1297, %v1320
        %v1325 = vadd.f32 %v1298, %v1321
        %1326 = vset.pattern.permute.xlu0 19
        %1327 = vperm.xlu0 %1326, %v518
        %v1328 = vpop.permute.xlu0 %1327
        %1330 = vset.pattern.permute.xlu0 19
        %1331 = vperm.xlu0 %1330, %v519
        %v1332 = vpop.permute.xlu0 %1331
        %v1334 = vmul.f32 %v559, %v1328
        %v1335 = vmul.f32 %v565, %v1328
        %v1336 = vmul.f32 %v560, %v1332
        %v1337 = vmul.f32 %v566, %v1332
        %s1338 = scalar_lea.vmem [#allocation2], 35
        %v1339 = vld [vmem:[%s1338] ss:$8 sm:$0x3]
        %v1341 = vperm.slane %v1339, 0
        %v1342 = vperm.slane %v1339, 1
        %v1345 = vmul.f32 %v1334, %v1341
        %v1346 = vmul.f32 %v1335, %v1342
        %v1347 = vmul.f32 %v1336, %v1341
        %v1348 = vmul.f32 %v1337, %v1342
        %v1349 = vadd.f32 %v1322, %v1345
        %v1350 = vadd.f32 %v1323, %v1346
        %v1351 = vadd.f32 %v1324, %v1347
        %v1352 = vadd.f32 %v1325, %v1348
        %1353 = vset.pattern.permute.xlu0 20
        %1354 = vperm.xlu0 %1353, %v518
        %v1355 = vpop.permute.xlu0 %1354
        %1357 = vset.pattern.permute.xlu0 20
        %1358 = vperm.xlu0 %1357, %v519
        %v1359 = vpop.permute.xlu0 %1358
        %v1361 = vmul.f32 %v605, %v1355
        %v1362 = vmul.f32 %v611, %v1355
        %v1363 = vmul.f32 %v606, %v1359
        %v1364 = vmul.f32 %v612, %v1359
        %s1365 = scalar_lea.vmem [#allocation2], 36
        %v1366 = vld [vmem:[%s1365] ss:$8 sm:$0x3]
        %v1368 = vperm.slane %v1366, 0
        %v1369 = vperm.slane %v1366, 1
        %v1372 = vmul.f32 %v1361, %v1368
        %v1373 = vmul.f32 %v1362, %v1369
        %v1374 = vmul.f32 %v1363, %v1368
        %v1375 = vmul.f32 %v1364, %v1369
        %v1376 = vadd.f32 %v1349, %v1372
        %v1377 = vadd.f32 %v1350, %v1373
        %v1378 = vadd.f32 %v1351, %v1374
        %v1379 = vadd.f32 %v1352, %v1375
        %1380 = vset.pattern.permute.xlu0 21
        %1381 = vperm.xlu0 %1380, %v518
        %v1382 = vpop.permute.xlu0 %1381
        %1384 = vset.pattern.permute.xlu0 21
        %1385 = vperm.xlu0 %1384, %v519
        %v1386 = vpop.permute.xlu0 %1385
        %v1388 = vmul.f32 %v651, %v1382
        %v1389 = vmul.f32 %v657, %v1382
        %v1390 = vmul.f32 %v652, %v1386
        %v1391 = vmul.f32 %v658, %v1386
        %s1392 = scalar_lea.vmem [#allocation2], 37
        %v1393 = vld [vmem:[%s1392] ss:$8 sm:$0x3]
        %v1395 = vperm.slane %v1393, 0
        %v1396 = vperm.slane %v1393, 1
        %v1399 = vmul.f32 %v1388, %v1395
        %v1400 = vmul.f32 %v1389, %v1396
        %v1401 = vmul.f32 %v1390, %v1395
        %v1402 = vmul.f32 %v1391, %v1396
        %v1403 = vadd.f32 %v1376, %v1399
        %v1404 = vadd.f32 %v1377, %v1400
        %v1405 = vadd.f32 %v1378, %v1401
        %v1406 = vadd.f32 %v1379, %v1402
        %1407 = vset.pattern.permute.xlu0 22
        %1408 = vperm.xlu0 %1407, %v518
        %v1409 = vpop.permute.xlu0 %1408
        %1411 = vset.pattern.permute.xlu0 22
        %1412 = vperm.xlu0 %1411, %v519
        %v1413 = vpop.permute.xlu0 %1412
        %v1415 = vmul.f32 %v697, %v1409
        %v1416 = vmul.f32 %v703, %v1409
        %v1417 = vmul.f32 %v698, %v1413
        %v1418 = vmul.f32 %v704, %v1413
        %s1419 = scalar_lea.vmem [#allocation2], 38
        %v1420 = vld [vmem:[%s1419] ss:$8 sm:$0x3]
        %v1422 = vperm.slane %v1420, 0
        %v1423 = vperm.slane %v1420, 1
        %v1426 = vmul.f32 %v1415, %v1422
        %v1427 = vmul.f32 %v1416, %v1423
        %v1428 = vmul.f32 %v1417, %v1422
        %v1429 = vmul.f32 %v1418, %v1423
        %v1430 = vadd.f32 %v1403, %v1426
        %v1431 = vadd.f32 %v1404, %v1427
        %v1432 = vadd.f32 %v1405, %v1428
        %v1433 = vadd.f32 %v1406, %v1429
        %1434 = vset.pattern.permute.xlu0 23
        %1435 = vperm.xlu0 %1434, %v518
        %v1436 = vpop.permute.xlu0 %1435
        %1438 = vset.pattern.permute.xlu0 23
        %1439 = vperm.xlu0 %1438, %v519
        %v1440 = vpop.permute.xlu0 %1439
        %v1442 = vmul.f32 %v743, %v1436
        %v1443 = vmul.f32 %v749, %v1436
        %v1444 = vmul.f32 %v744, %v1440
        %v1445 = vmul.f32 %v750, %v1440
        %s1446 = scalar_lea.vmem [#allocation2], 39
        %v1447 = vld [vmem:[%s1446] ss:$8 sm:$0x3]
        %v1449 = vperm.slane %v1447, 0
        %v1450 = vperm.slane %v1447, 1
        %v1453 = vmul.f32 %v1442, %v1449
        %v1454 = vmul.f32 %v1443, %v1450
        %v1455 = vmul.f32 %v1444, %v1449
        %v1456 = vmul.f32 %v1445, %v1450
        %v1457 = vadd.f32 %v1430, %v1453
        %v1458 = vadd.f32 %v1431, %v1454
        %v1459 = vadd.f32 %v1432, %v1455
        %v1460 = vadd.f32 %v1433, %v1456
        %1461 = vset.pattern.permute.xlu0 24
        %1462 = vperm.xlu0 %1461, %v518
        %v1463 = vpop.permute.xlu0 %1462
        %1465 = vset.pattern.permute.xlu0 24
        %1466 = vperm.xlu0 %1465, %v519
        %v1467 = vpop.permute.xlu0 %1466
        %v1469 = vmul.f32 %v789, %v1463
        %v1470 = vmul.f32 %v795, %v1463
        %v1471 = vmul.f32 %v790, %v1467
        %v1472 = vmul.f32 %v796, %v1467
        %s1473 = scalar_lea.vmem [#allocation2], 48
        %v1474 = vld [vmem:[%s1473] ss:$8 sm:$0x3]
        %v1476 = vperm.slane %v1474, 0
        %v1477 = vperm.slane %v1474, 1
        %v1480 = vmul.f32 %v1469, %v1476
        %v1481 = vmul.f32 %v1470, %v1477
        %v1482 = vmul.f32 %v1471, %v1476
        %v1483 = vmul.f32 %v1472, %v1477
        %v1484 = vadd.f32 %v1457, %v1480
        %v1485 = vadd.f32 %v1458, %v1481
        %v1486 = vadd.f32 %v1459, %v1482
        %v1487 = vadd.f32 %v1460, %v1483
        %1488 = vset.pattern.permute.xlu0 25
        %1489 = vperm.xlu0 %1488, %v518
        %v1490 = vpop.permute.xlu0 %1489
        %1492 = vset.pattern.permute.xlu0 25
        %1493 = vperm.xlu0 %1492, %v519
        %v1494 = vpop.permute.xlu0 %1493
        %v1496 = vmul.f32 %v835, %v1490
        %v1497 = vmul.f32 %v841, %v1490
        %v1498 = vmul.f32 %v836, %v1494
        %v1499 = vmul.f32 %v842, %v1494
        %s1500 = scalar_lea.vmem [#allocation2], 49
        %v1501 = vld [vmem:[%s1500] ss:$8 sm:$0x3]
        %v1503 = vperm.slane %v1501, 0
        %v1504 = vperm.slane %v1501, 1
        %v1507 = vmul.f32 %v1496, %v1503
        %v1508 = vmul.f32 %v1497, %v1504
        %v1509 = vmul.f32 %v1498, %v1503
        %v1510 = vmul.f32 %v1499, %v1504
        %v1511 = vadd.f32 %v1484, %v1507
        %v1512 = vadd.f32 %v1485, %v1508
        %v1513 = vadd.f32 %v1486, %v1509
        %v1514 = vadd.f32 %v1487, %v1510
        %1515 = vset.pattern.permute.xlu0 26
        %1516 = vperm.xlu0 %1515, %v518
        %v1517 = vpop.permute.xlu0 %1516
        %1519 = vset.pattern.permute.xlu0 26
        %1520 = vperm.xlu0 %1519, %v519
        %v1521 = vpop.permute.xlu0 %1520
        %v1523 = vmul.f32 %v881, %v1517
        %v1524 = vmul.f32 %v887, %v1517
        %v1525 = vmul.f32 %v882, %v1521
        %v1526 = vmul.f32 %v888, %v1521
        %s1527 = scalar_lea.vmem [#allocation2], 50
        %v1528 = vld [vmem:[%s1527] ss:$8 sm:$0x3]
        %v1530 = vperm.slane %v1528, 0
        %v1531 = vperm.slane %v1528, 1
        %v1534 = vmul.f32 %v1523, %v1530
        %v1535 = vmul.f32 %v1524, %v1531
        %v1536 = vmul.f32 %v1525, %v1530
        %v1537 = vmul.f32 %v1526, %v1531
        %v1538 = vadd.f32 %v1511, %v1534
        %v1539 = vadd.f32 %v1512, %v1535
        %v1540 = vadd.f32 %v1513, %v1536
        %v1541 = vadd.f32 %v1514, %v1537
        %v1542 = vld [vmem:[%s6] sm:$0xff]
        %v1543 = vld [vmem:[%s6 + $0x8] sm:$0xff]
        %1545 = vset.pattern.permute.xlu0 0
        %1546 = vperm.xlu0 %1545, %v1542
        %v1547 = vpop.permute.xlu0 %1546
        %1550 = vset.pattern.permute.xlu0 0
        %1551 = vperm.xlu0 %1550, %v1543
        %v1552 = vpop.permute.xlu0 %1551
        %v1554 = vmul.f32 %v1538, %v1547
        %v1555 = vmul.f32 %v1539, %v1547
        %v1556 = vmul.f32 %v1540, %v1552
        %v1557 = vmul.f32 %v1541, %v1552
        %v1558 = vld [vmem:[%s7] sm:$0xff]
        %v1559 = vld [vmem:[%s7 + $0x8] sm:$0xff]
        %1561 = vset.pattern.permute.xlu0 0
        %1562 = vperm.xlu0 %1561, %v1558
        %v1563 = vpop.permute.xlu0 %1562
        %1566 = vset.pattern.permute.xlu0 0
        %1567 = vperm.xlu0 %1566, %v1559
        %v1568 = vpop.permute.xlu0 %1567
        %v1570 = vadd.f32 %v1554, %v1563
        %v1571 = vadd.f32 %v1555, %v1563
        %v1572 = vadd.f32 %v1556, %v1568
        %v1573 = vadd.f32 %v1557, %v1568
        %v1574 = vmax.f32 %v1570, 0.0
        %v1575 = vmax.f32 %v1571, 0.0
        %v1576 = vmax.f32 %v1572, 0.0
        %v1577 = vmax.f32 %v1573, 0.0
        %v1578 = vmin.f32 %v1574, 6.0
        %v1579 = vmin.f32 %v1575, 6.0
        %v1580 = vmin.f32 %v1576, 6.0
        %v1581 = vmin.f32 %v1577, 6.0
        %v1582 = vld [vmem:[%s8] sm:$0xf]
        %v1583 = vunpack.c.l.bf16 %v1582
        %vm1584 = vcmask 130048
        %v1586 = vsel %vm1584, %v1583, 0
        %1588 = vmatpush.msra.mxu0 0.0
        %1589 = vmatpush.msra.mxu0 0.0
        %1590 = vmatpush.msra.mxu0 0.0
        %1591 = vmatpush.msra.mxu0 0.0
        %1592 = vmatpush.msra.mxu0 0.0
        %1593 = vmatpush.msra.mxu0 0.0
        %1594 = vmatpush.msra.mxu0 0.0
        %1595 = vmatpush.msra.mxu0 0.0
        %1596 = vmatpush.msra.mxu0 0.0
        %1597 = vmatpush.msra.mxu0 0.0
        %1598 = vmatpush.msra.mxu0 0.0
        %1599 = vmatpush.msra.mxu0 0.0
        %1600 = vmatpush.msra.mxu0 0.0
        %1601 = vmatpush.msra.mxu0 0.0
        %1602 = vmatpush.msra.mxu0 %v1580
        %1603 = vmatpush.msra.mxu0 %v1578
        %1604 = vmatmul.f32.gmra.mxu0 %v1586
        %v1605 = vpop.f32.mrf.mxu0
        %v1606 = vadd.f32 0.0, %v1605
        %1607 = vdwg.mxu0
        %1608 = vmatpush.msra.mxu0 0.0
        %1609 = vmatpush.msra.mxu0 0.0
        %1610 = vmatpush.msra.mxu0 0.0
        %1611 = vmatpush.msra.mxu0 0.0
        %1612 = vmatpush.msra.mxu0 0.0
        %1613 = vmatpush.msra.mxu0 0.0
        %1614 = vmatpush.msra.mxu0 0.0
        %1615 = vmatpush.msra.mxu0 0.0
        %1616 = vmatpush.msra.mxu0 0.0
        %1617 = vmatpush.msra.mxu0 0.0
        %1618 = vmatpush.msra.mxu0 0.0
        %1619 = vmatpush.msra.mxu0 0.0
        %1620 = vmatpush.msra.mxu0 0.0
        %1621 = vmatpush.msra.mxu0 0.0
        %1622 = vmatpush.msra.mxu0 %v1581
        %1623 = vmatpush.msra.mxu0 %v1579
        %1624 = vmatmul.f32.gmra.mxu0 %v1586
        %v1625 = vpop.f32.mrf.mxu0
        %v1626 = vadd.f32 0.0, %v1625
        %1627 = vdwg.mxu0
        %v1628 = vld [vmem:[%s9] sm:$0xff]
        %1630 = vset.pattern.permute.xlu0 0
        %1631 = vperm.xlu0 %1630, %v1628
        %v1632 = vpop.permute.xlu0 %1631
        %v1634 = vmul.f32 %v1606, %v1632
        %v1635 = vmul.f32 %v1626, %v1632
        %v1636 = vld [vmem:[%s10] sm:$0xff]
        %1638 = vset.pattern.permute.xlu0 0
        %1639 = vperm.xlu0 %1638, %v1636
        %v1640 = vpop.permute.xlu0 %1639
        %v1642 = vadd.f32 %v1634, %v1640
        %v1643 = vadd.f32 %v1635, %v1640
        %v1644 = vunpack.c.l.bf16 %v403
        %v1645 = vunpack.c.h.bf16 %v403
        %v1646 = vadd.f32 %v1642, %v1644
        %v1647 = vadd.f32 %v1643, %v1645
        %1648 = vst [vmem:[%s396] sm:$0xff] %v1646
        %1649 = vst [vmem:[%s396 + $0x8] sm:$0xff] %v1647
        %s1650 = sand.u32 %s270, 1
        %s1651 = scalar_lea.sflag [#allocation4], %s1650
        %s1652 = sand.u32 %s270, 1
        %s1653 = smul.addr %s1652, 16
        %s1654 = scalar_lea.vmem [#allocation5], %s1653
        // Predicated region
        $region69: #{tpu_custom_call.1} parent=63 // pred_check
          %p1655 = pneg %p280
        $region70: #{tpu_custom_call.1} parent=63 // pred_check_branch
          %1657 = sbr.rel (%p1655) target = $region72
        $region71: #{tpu_custom_call.1} parent=63 // pred_region
          %1659 = vsyncadd %s1651, 0
          %s1660 = smul.addr %s26, 2
          %s1661 = smul.addr %s1660, 8
          %s1662 = scalar_lea.hbm %s11, %s1661
          %s1664 = sshll.u32 %s1654, 4
          %s1665 = int_to_ptr.vmem [resolvable:$true] %s1664
          %s1666 = sshll.u32 %s1662, 4
          %s1667 = int_to_ptr.hbm [resolvable:$true] %s1666
          %1669 = dma.vmem_to_hbm [thread:$0]  %s1665, 256, %s1667, %s1651
        $region72: #{tpu_custom_call.1} parent=63 // pred_fallthru
          _
      $region64: #{tpu_custom_call.1} parent=5 // pred_fallthru
        _
      %p1670 = scmp.le.s32.totalorder 2, %s21
      // Predicated region
      $region73: #{tpu_custom_call.1} parent=5 // pred_check
        %p1671 = pneg %p1670
      $region74: #{tpu_custom_call.1} parent=5 // pred_check_branch
        %1673 = sbr.rel (%p1671) target = $region76
      $region75: #{tpu_custom_call.1} parent=5 // pred_region
        %s1674 = ssub.s32 %s21, 2
        // Predicated region
        $region77: #{tpu_custom_call.1} parent=75 // pred_check
          %p1675 = pneg %p286
        $region78: #{tpu_custom_call.1} parent=75 // pred_check_branch
          %1677 = sbr.rel (%p1675) target = $region80
        $region79: #{tpu_custom_call.1} parent=75 // pred_region
          %s1678 = sand.u32 %s271, 1
          %s1679 = scalar_lea.sflag [#allocation4], %s1678
          %s1680 = sand.u32 %s271, 1
          %s1681 = smul.addr %s1680, 16
          %s1682 = scalar_lea.vmem [#allocation5], %s1681
          %1684 = dma.done %s1679, 256
        $region80: #{tpu_custom_call.1} parent=75 // pred_fallthru
          _
      $region76: #{tpu_custom_call.1} parent=5 // pred_fallthru
        _
    $region6: #{tpu_custom_call.1} parent=1 // loop_footer
      %s25 = sadd.s32 1, %s21
    $region7: #{tpu_custom_call.1} parent=1 // loop_footer_branch
      %20 = sbr.rel target = $region3
    $region8: #{tpu_custom_call.1} parent=1 // loop_exit
      _
    %1685 = vsyncpa [#allocation3], 1
    %s1686 = scalar_lea.sflag [#allocation3], 1
    %1687 = vsyncpa %s1686, 1
    %1688 = vsyncpa [#allocation4], 1
    %s1689 = scalar_lea.sflag [#allocation4], 1
    %1690 = vsyncpa %s1689, 1

</llo_original>
